<compile_context>
chip_gen: v7x
topology: tpu7x:2x2x1
jax: 0.10.0
libtpu: 0.0.40
codegen_flags: <defaults>
</compile_context>

<pallas_src>
import jax
import jax.numpy as jnp
from jax.experimental import pallas as pl
from jax.experimental.pallas import tpu as pltpu

# ------------------------------ model sizes ------------------------------
B = 2            # batch
IMG_HW = 28      # input spatial -> encoder output 14x14
FC = 512         # encoder feature channels (decoder hard-codes view(-1, 196, 512))
P = 196          # 14 * 14 spatial positions
V = 32           # vocab_size  (TEXT.vocab.vectors.size(0))
VPAD = 128       # vocab padded to a full lane group for lane-dense stores
E = 16           # embed_dim   (TEXT.vocab.vectors.size(1))
H = 128          # hidden_dim
A = 512          # attn_dim (== FC; LSTM input dim = embed_dim + attn_dim)
C1 = 64          # channels after first conv block
C1P = 128        # conv1 output channels padded to a full lane group
EPS = 1e-5


# ------------------------------ Pallas kernels ------------------------------
def _conv_bn_relu_kernel(p_ref, w_ref, scale_ref, shift_ref, o_ref):
    """im2col conv as one bf16 MXU matmul (f32 accumulate), fused eval-BN scale/shift + ReLU."""
    y = jnp.dot(p_ref[...], w_ref[...], preferred_element_type=jnp.float32)
    o_ref[...] = jnp.maximum(y * scale_ref[...] + shift_ref[...], 0.0).astype(o_ref.dtype)


def _decoder_kernel(nb_ref, battn_ref,
                    patches_ref, w2_ref, scale2_ref, shift2_ref,
                    emb_ref, pfw_ref, fbias_ref, whp_ref, wattn_ref,
                    wie_ref, blstm_ref, wcomb_ref, wex_ref, bex_ref,
                    out_ref, embp_ref):
    """conv2+BN+ReLU (fused encoder tail) + proj_feature + (attention + LSTM + exit) x T.

    All matmuls use bf16 operands with f32 MXU accumulation; the feature map stays in VMEM.
    The recurrence is a fori_loop carrying (h, c); per-step active-row counts
    (reference: batch_size = sum(i >= t for i in lengths)) come from SMEM.
    """
    t_max, bsz, _ = out_ref.shape
    n_pos = patches_ref.shape[0] // bsz            # 196
    adim = whp_ref.shape[1]                        # attn_dim
    hd = wex_ref.shape[0]                          # hidden_dim

    # ---- encoder tail: conv2 (im2col matmul) + eval BN + ReLU; feature never leaves VMEM ----
    feat_f32 = jnp.maximum(
        jnp.dot(patches_ref[...], w2_ref[...], preferred_element_type=jnp.float32)
        * scale2_ref[...] + shift2_ref[...], 0.0)                        # (B*P, FC) f32
    feat_flat = feat_f32.astype(jnp.bfloat16)                            # (B*P, FC) bf16
    feat = feat_flat.reshape(bsz, n_pos, -1)                             # (B, P, FC)

    # ---- proj_feature with BOTH attention biases folded in (computed once) ----
    fproj = (jnp.dot(feat_flat, pfw_ref[...], preferred_element_type=jnp.float32)
             + fbias_ref[...])                                           # (B*P, A) f32
    fproj = fproj.astype(jnp.bfloat16).reshape(bsz, n_pos, adim)         # (B, P, A) bf16

    # ---- embedding projection + fused LSTM biases, hoisted out of the recurrence ----
    embp_ref[...] = (jnp.dot(emb_ref[...], wie_ref[...],
                             preferred_element_type=jnp.float32)
                     + blstm_ref[...]).reshape(t_max, bsz, -1)           # (T, B, 4H) f32

    # ---- loop-invariant operands (broadcasts hoisted; JAX does not CSE them) ----
    whp = whp_ref[...]
    wcomb = wcomb_ref[...]
    wex = wex_ref[...]
    bex = bex_ref[...]
    wattn_b = jnp.broadcast_to(wattn_ref[...].reshape(1, 1, adim), (bsz, 1, adim))
    battn = battn_ref[0]
    row_id = jax.lax.broadcasted_iota(jnp.int32, (bsz, 1), 0)

    def step(t, carry):
        h, c = carry                                                     # (B, H) f32
        h_bf = h.astype(jnp.bfloat16)

        # ---- soft attention: score + context reductions on the MXU, bf16 operands ----
        h_attn = jnp.dot(h_bf, whp, preferred_element_type=jnp.float32)  # (B, A)
        attn_in = jnp.maximum(fproj + h_attn.astype(jnp.bfloat16)[:, None, :], 0.0)
        s = jnp.einsum('bqa,bpa->bqp', wattn_b, attn_in,
                       preferred_element_type=jnp.float32)               # (B, 1, P)
        scores = s[:, 0, :] + battn                                      # (B, P)
        scores = scores - jnp.max(scores, axis=-1, keepdims=True)
        ex = jnp.exp(scores)
        alpha = ex / jnp.sum(ex, axis=-1, keepdims=True)                 # exact softmax
        ctx = jnp.einsum('bqp,bpf->bqf',
                         alpha.astype(jnp.bfloat16)[:, None, :], feat,
                         preferred_element_type=jnp.float32)[:, 0, :]    # (B, FC) f32

        # ---- LSTM cell (PyTorch gate order i,f,g,o; input = [context, embed]) ----
        # one fused matmul for [context, h] @ [W_ih_ctx ; W_hh]; embed part precomputed.
        xh = jnp.concatenate([ctx.astype(jnp.bfloat16), h_bf], axis=1)   # (B, A+H) bf16
        gates = (jnp.dot(xh, wcomb, preferred_element_type=jnp.float32)
                 + embp_ref[t])                                          # (B, 4H) f32
        i_g = jax.nn.sigmoid(gates[:, 0 * hd:1 * hd])
        f_g = jax.nn.sigmoid(gates[:, 1 * hd:2 * hd])
        g_g = jnp.tanh(gates[:, 2 * hd:3 * hd])
        o_g = jax.nn.sigmoid(gates[:, 3 * hd:4 * hd])
        c_new = f_g * c + i_g * g_g
        h_new = o_g * jnp.tanh(c_new)

        # ---- output projection (V padded to 128 lanes) + reference length masking ----
        logits = (jnp.dot(h_new.astype(jnp.bfloat16), wex,
                          preferred_element_type=jnp.float32) + bex)     # (B, VPAD)
        out_ref[t] = jnp.where(row_id < nb_ref[t], logits, 0.0)
        return h_new, c_new

    jax.lax.fori_loop(
        0, t_max, step,
        (jnp.zeros((bsz, hd), jnp.float32), jnp.zeros((bsz, hd), jnp.float32)))


# ------------------------------ encoder wrappers (glue) ------------------------------
def _im2col_3x3(x_nhwc):
    """3x3, pad=1, stride=1 patches; batch flattened into the matmul M dimension."""
    b, h, w, cin = x_nhwc.shape
    xp = jnp.pad(x_nhwc, ((0, 0), (1, 1), (1, 1), (0, 0)))
    cols = [xp[:, kh:kh + h, kw:kw + w, :] for kh in range(3) for kw in range(3)]
    return jnp.concatenate(cols, axis=-1).reshape(b * h * w, 9 * cin)


def _maxpool2x2(x):
    b, h, w, c = x.shape
    return x.reshape(b, h // 2, 2, w // 2, 2, c).max(axis=(2, 4))


def conv1_bn_relu(x_nhwc, w_oihw, conv_b, gamma, beta, mean, var, cout_pad=C1P):
    """3x3 conv (pad=1) + eval BN + ReLU; output channels zero-padded to 128 lanes, bf16 out."""
    b, h, w, cin = x_nhwc.shape
    cout = w_oihw.shape[0]
    patches = _im2col_3x3(x_nhwc).astype(jnp.bfloat16)                   # (B*H*W, 9*cin)
    wmat = jnp.transpose(w_oihw, (2, 3, 1, 0)).reshape(9 * cin, cout)    # (9*cin, cout)
    scale = gamma / jnp.sqrt(var + EPS)
    shift = (conv_b - mean) * scale + beta
    pad = cout_pad - cout
    wmat = jnp.pad(wmat, ((0, 0), (0, pad))).astype(jnp.bfloat16)
    scale = jnp.pad(scale, (0, pad))[None, :].astype(jnp.float32)
    shift = jnp.pad(shift, (0, pad))[None, :].astype(jnp.float32)
    m, k = patches.shape
    out = pl.pallas_call(
        _conv_bn_relu_kernel,
        out_shape=jax.ShapeDtypeStruct((m, cout_pad), jnp.bfloat16),
        grid=(1,),
        in_specs=[
            pl.BlockSpec((m, k), lambda i: (0, 0)),
            pl.BlockSpec((k, cout_pad), lambda i: (0, 0)),
            pl.BlockSpec((1, cout_pad), lambda i: (0, 0)),
            pl.BlockSpec((1, cout_pad), lambda i: (0, 0)),
        ],
        out_specs=pl.BlockSpec((m, cout_pad), lambda i: (0, 0)),
        compiler_params=pltpu.CompilerParams(dimension_semantics=("arbitrary",)),
    )(patches, wmat, scale, shift)
    return out.reshape(b, h, w, cout_pad)


# ------------------------------ decoder wrapper ------------------------------
def decoder_forward(p, patches2, caption, lengths):
    """AttentionDecoder.forward (+ fused conv2 encoder tail): returns (B * lengths[0], V)."""
    bsz = patches2.shape[0] // P
    t_max = int(lengths[0])

    # per-step active-row counts: batch_size = sum(i >= t for i in lengths)  (SMEM scalars)
    nb = jnp.asarray([sum(1 for l in lengths if l >= t) for t in range(t_max)], jnp.int32)
    battn = p["attn_hid_b"].reshape(1).astype(jnp.float32)

    # embedding lookup (glue): (T*B, E) bf16, time-major
    emb = jnp.transpose(jnp.take(p["emb_w"], caption[:, :t_max], axis=0), (1, 0, 2))
    emb = emb.reshape(t_max * bsz, -1).astype(jnp.bfloat16)

    # weight plumbing (glue); all MXU operands in bf16
    w2 = jnp.pad(jnp.transpose(p["conv2_w"], (2, 3, 1, 0)),
                 ((0, 0), (0, 0), (0, C1P - C1), (0, 0))).reshape(9 * C1P, FC).astype(jnp.bfloat16)
    scale2 = (p["bn2_g"] / jnp.sqrt(p["bn2_v"] + EPS)).astype(jnp.float32)
    shift2 = ((p["conv2_b"] - p["bn2_m"]) * scale2 + p["bn2_b"]).astype(jnp.float32)
    pfw = p["proj_feat_w"].T.astype(jnp.bfloat16)                        # (FC, A)
    fbias = (p["proj_feat_b"] + p["proj_hid_b"])[None, :]                # (1, A)  both attn biases
    whp = p["proj_hid_w"].T.astype(jnp.bfloat16)                         # (H, A)
    wattn = p["attn_hid_w"].astype(jnp.bfloat16)                         # (1, A)
    wie = p["w_ih"][:, A:].T.astype(jnp.bfloat16)                        # (E, 4H)  embed part
    blstm = (p["b_ih"] + p["b_hh"])[None, :]                             # (1, 4H)
    wcomb = jnp.concatenate([p["w_ih"][:, :A].T, p["w_hh"].T],
                            axis=0).astype(jnp.bfloat16)                 # (A+H, 4H) [ctx ; h]
    wex = jnp.zeros((H, VPAD), jnp.float32).at[:, :V].set(p["exit_w"].T).astype(jnp.bfloat16)
    bex = jnp.zeros((1, VPAD), jnp.float32).at[0, :V].set(p["exit_b"])

    def vfull(shape):
        return pl.BlockSpec(shape, lambda i, _s=shape: (0,) * len(_s))
    smem = pl.BlockSpec(memory_space=pltpu.MemorySpace.SMEM)

    out = pl.pallas_call(
        _decoder_kernel,
        out_shape=jax.ShapeDtypeStruct((t_max, bsz, VPAD), jnp.float32),
        grid=(1,),
        in_specs=[
            smem, smem,                                        # nb, battn (SMEM scalars)
            vfull((bsz * P, 9 * C1P)), vfull((9 * C1P, FC)),   # conv2 patches / weights
            vfull((1, FC)), vfull((1, FC)),                    # conv2 BN scale / shift
            vfull((t_max * bsz, E)),                           # embeddings
            vfull((FC, A)), vfull((1, A)),                     # proj_feature (+ folded biases)
            vfull((H, A)), vfull((1, A)),                      # proj_hidden, attn_hidden weights
            vfull((E, 4 * H)), vfull((1, 4 * H)),              # W_ih embed part, fused LSTM bias
            vfull((A + H, 4 * H)),                             # [W_ih_ctx ; W_hh]
            vfull((H, VPAD)), vfull((1, VPAD)),                # exit (padded to 128 lanes)
        ],
        out_specs=vfull((t_max, bsz, VPAD)),
        scratch_shapes=[pltpu.VMEM((t_max, bsz, 4 * H), jnp.float32)],
        compiler_params=pltpu.CompilerParams(
            dimension_semantics=("arbitrary",),
            vmem_limit_bytes=32 * 1024 * 1024),
    )(nb, battn, patches2, w2, scale2[None, :], shift2[None, :], emb,
      pfw, fbias, whp, wattn, wie, blstm, wcomb, wex, bex)

    # PyTorch: predicts is (B, T, V).view(-1, V)
    return jnp.transpose(out[:, :, :V], (1, 0, 2)).reshape(bsz * t_max, V)


def net_forward(p, image_nchw, caption, lengths):
    # layout: transpose PyTorch NCHW -> NHWC once for the conv kernels.
    x = jnp.transpose(image_nchw, (0, 2, 3, 1)).astype(jnp.float32)      # (B, 28, 28, 3)
    x = conv1_bn_relu(x, p["conv1_w"], p["conv1_b"],
                      p["bn1_g"], p["bn1_b"], p["bn1_m"], p["bn1_v"])    # (B, 28, 28, 128) bf16
    x = _maxpool2x2(x)                                                   # (B, 14, 14, 128) bf16
    patches2 = _im2col_3x3(x)                                            # (B*196, 1152) bf16
    # conv2 + feature.permute(0,2,3,1).view(-1,196,512) + decoder all fused in one kernel
    return decoder_forward(p, patches2, caption, lengths)


# ------------------------------ parameters ------------------------------
def init_params(key):
    ks = jax.random.split(key, 26)
    n = lambda k, shape, s=0.05: (s * jax.random.normal(k, shape)).astype(jnp.float32)
    p = {}
    # encoder (truncated VGG19_bn-style), PyTorch OIHW conv weights
    p["conv1_w"] = n(ks[0], (C1, 3, 3, 3), 0.2)
    p["conv1_b"] = n(ks[1], (C1,))
    p["bn1_g"] = 1.0 + n(ks[2], (C1,))
    p["bn1_b"] = n(ks[3], (C1,))
    p["bn1_m"] = n(ks[4], (C1,))
    p["bn1_v"] = jax.random.uniform(ks[5], (C1,), minval=0.5, maxval=1.5).astype(jnp.float32)
    p["conv2_w"] = n(ks[6], (FC, C1, 3, 3), 0.05)
    p["conv2_b"] = n(ks[7], (FC,))
    p["bn2_g"] = 1.0 + n(ks[8], (FC,))
    p["bn2_b"] = n(ks[9], (FC,))
    p["bn2_m"] = n(ks[10], (FC,))
    p["bn2_v"] = jax.random.uniform(ks[11], (FC,), minval=0.5, maxval=1.5).astype(jnp.float32)
    # decoder
    p["emb_w"] = n(ks[12], (V, E), 0.1)          # TEXT.vocab.vectors (frozen)
    p["w_ih"] = n(ks[13], (4 * H, E + A), 0.05)  # LSTM weight_ih_l0 (gate order i,f,g,o)
    p["w_hh"] = n(ks[14], (4 * H, H), 0.05)
    p["b_ih"] = n(ks[15], (4 * H,))
    p["b_hh"] = n(ks[16], (4 * H,))
    p["exit_w"] = n(ks[17], (V, H), 0.1)
    p["exit_b"] = n(ks[18], (V,))
    p["proj_feat_w"] = n(ks[19], (A, FC), 0.05)
    p["proj_feat_b"] = n(ks[20], (A,))
    p["proj_hid_w"] = n(ks[21], (A, H), 0.05)
    p["proj_hid_b"] = n(ks[22], (A,))
    p["attn_hid_w"] = n(ks[23], (1, A), 0.05)
    p["attn_hid_b"] = n(ks[24], (1,))
    return p


# ------------------------------ main ------------------------------
if __name__ == "__main__":
    root = jax.random.PRNGKey(0)
    k_param, k_img, k_cap = jax.random.split(root, 3)

    params = init_params(k_param)
    lengths = [5, 3]                                   # sorted descending, lengths[0] = T
    T = lengths[0]
    image = jax.random.normal(k_img, (B, 3, IMG_HW, IMG_HW), dtype=jnp.float32)   # NCHW
    caption = jax.random.randint(k_cap, (B, T), 0, V, dtype=jnp.int32)

    out = net_forward(params, image, caption, lengths)
    out = jax.block_until_ready(out)

    assert out.shape == (B * T, V), out.shape
    assert bool(jnp.all(jnp.isfinite(out)))
    print("KERNEL_OK")
</pallas_src>

<mosaic_0001>
module attributes {stable_mosaic.version = 11 : i64} {
  func.func @_conv_bn_relu_kernel(%arg0: i32, %arg1: memref<1568x27xbf16, #tpu.memory_space<vmem>>, %arg2: memref<27x128xbf16, #tpu.memory_space<vmem>>, %arg3: memref<1x128xf32, #tpu.memory_space<vmem>>, %arg4: memref<1x128xf32, #tpu.memory_space<vmem>>, %arg5: memref<1568x128xbf16, #tpu.memory_space<vmem>>) attributes {dimension_semantics = [#tpu.dimension_semantics<arbitrary>], iteration_bounds = array<i64: 1>, scalar_prefetch = 0 : i64, scratch_operands = 0 : i64, tpu.core_type = #tpu.core_type<tc>, window_params = [{pipeline_mode = #tpu.pipeline_mode<synchronous>, transform_indices = @transform_0, window_bounds = array<i64: 1568, 27>}, {pipeline_mode = #tpu.pipeline_mode<synchronous>, transform_indices = @transform_1, window_bounds = array<i64: 27, 128>}, {pipeline_mode = #tpu.pipeline_mode<synchronous>, transform_indices = @transform_2, window_bounds = array<i64: 1, 128>}, {pipeline_mode = #tpu.pipeline_mode<synchronous>, transform_indices = @transform_3, window_bounds = array<i64: 1, 128>}, {pipeline_mode = #tpu.pipeline_mode<synchronous>, transform_indices = @transform_4, window_bounds = array<i64: 1568, 128>}]} {
    %c0 = arith.constant 0 : index
    %c0_0 = arith.constant 0 : index
    %0 = vector.load %arg1[%c0, %c0_0] : memref<1568x27xbf16, #tpu.memory_space<vmem>>, vector<1568x27xbf16>
    %c0_1 = arith.constant 0 : index
    %c0_2 = arith.constant 0 : index
    %1 = vector.load %arg2[%c0_1, %c0_2] : memref<27x128xbf16, #tpu.memory_space<vmem>>, vector<27x128xbf16>
    %cst = arith.constant dense<0.000000e+00> : vector<1568x128xf32>
    %2 = tpu.matmul %0, %1, %cst {dimension_numbers = #tpu.dot_dimension_numbers<[1], [0], [0], [1], [0, 0, 1, 1], [], []>} : vector<1568x27xbf16>, vector<27x128xbf16>, vector<1568x128xf32> -> vector<1568x128xf32>
    %c0_3 = arith.constant 0 : index
    %c0_4 = arith.constant 0 : index
    %3 = vector.load %arg3[%c0_3, %c0_4] : memref<1x128xf32, #tpu.memory_space<vmem>>, vector<1x128xf32>
    %4 = vector.broadcast %3 : vector<1x128xf32> to vector<1568x128xf32>
    %5 = arith.mulf %2, %4 : vector<1568x128xf32>
    %c0_5 = arith.constant 0 : index
    %c0_6 = arith.constant 0 : index
    %6 = vector.load %arg4[%c0_5, %c0_6] : memref<1x128xf32, #tpu.memory_space<vmem>>, vector<1x128xf32>
    %7 = vector.broadcast %6 : vector<1x128xf32> to vector<1568x128xf32>
    %8 = arith.addf %5, %7 : vector<1568x128xf32>
    %cst_7 = arith.constant 0.000000e+00 : f32
    %9 = vector.broadcast %cst_7 : f32 to vector<1568x128xf32>
    %10 = arith.maximumf %8, %9 : vector<1568x128xf32>
    %11 = arith.truncf %10 : vector<1568x128xf32> to vector<1568x128xbf16>
    %c0_8 = arith.constant 0 : index
    %c0_9 = arith.constant 0 : index
    %12 = vector.load %arg5[%c0_8, %c0_9] : memref<1568x128xbf16, #tpu.memory_space<vmem>>, vector<1568x128xbf16>
    tpu.vector_store %arg5[%c0_8, %c0_9], %11 {strides = array<i32>} : memref<1568x128xbf16, #tpu.memory_space<vmem>>, vector<1568x128xbf16>,
    return
  }
  func.func @transform_0(%arg0: i32) -> (i32, i32) {
    %c0_i32 = arith.constant 0 : i32
    %c0_i32_0 = arith.constant 0 : i32
    %c0_i32_1 = arith.constant 0 : i32
    return %c0_i32, %c0_i32_0 : i32, i32
  }
  func.func @transform_1(%arg0: i32) -> (i32, i32) {
    %c0_i32 = arith.constant 0 : i32
    %c0_i32_0 = arith.constant 0 : i32
    %c0_i32_1 = arith.constant 0 : i32
    return %c0_i32, %c0_i32_0 : i32, i32
  }
  func.func @transform_2(%arg0: i32) -> (i32, i32) {
    %c0_i32 = arith.constant 0 : i32
    %c0_i32_0 = arith.constant 0 : i32
    %c0_i32_1 = arith.constant 0 : i32
    return %c0_i32, %c0_i32_0 : i32, i32
  }
  func.func @transform_3(%arg0: i32) -> (i32, i32) {
    %c0_i32 = arith.constant 0 : i32
    %c0_i32_0 = arith.constant 0 : i32
    %c0_i32_1 = arith.constant 0 : i32
    return %c0_i32, %c0_i32_0 : i32, i32
  }
  func.func @transform_4(%arg0: i32) -> (i32, i32) {
    %c0_i32 = arith.constant 0 : i32
    %c0_i32_0 = arith.constant 0 : i32
    %c0_i32_1 = arith.constant 0 : i32
    return %c0_i32, %c0_i32_0 : i32, i32
  }
}

</mosaic_0001>

<llo_original>
// kernel: tpu_custom_call.1
$region0: #{tpu_custom_call.1}
  #allocation0 [shape = 'u32[]', space=smem, size = 0x4, offset = 0x4, fixed_abs, tag = 'smem constant byte address 0x4 - core index']
  #allocation1 [shape = 'u32[144,128]{1,0:T(1,128)}', space=vmem, size = 0x12000, scoped, tag = 'internal scratch']
  %s0 = inlined_call_operand.vmem [shape: bf16[1568,27], index: 0, kind: input, shape index: {}]
  %s1 = inlined_call_operand.vmem [shape: bf16[27,128], index: 1, kind: input, shape index: {}]
  %s2 = inlined_call_operand.vmem [shape: f32[1,128], index: 2, kind: input, shape index: {}]
  %s3 = inlined_call_operand.vmem [shape: f32[1,128], index: 3, kind: input, shape index: {}]
  %s4 = inlined_call_operand.hbm [shape: bf16[1568,128], index: 4, kind: output, shape index: {}]
  %s5 = sld [smem:[#allocation0]]
  $region26: #{tpu_custom_call.1} parent=0
    _
  %s7 = ssub.s32 1, %s5
  %s8 = scalar_select 0, %s7, %s5
  $region1: #{tpu_custom_call.1} parent=0
    #allocation2 [shape = 'u8[401408]{0}', space=vmem, size = 0x62000, scoped, tag = 'output window, operand 0, single buffered']
    #allocation3 [shape = 's32[1]{0}', space=sflag, size = 0x4, scoped, tag = 'scoped memory for tpu_custom_call.1']
    %9 = vsyncpa [#allocation3], 0
    // Predicated region
    $region2: #{tpu_custom_call.1} parent=1 // pred_check
      _
    $region3: #{tpu_custom_call.1} parent=1 // pred_check_branch
      %11 = sbr.rel (0) target = $region5
    $region4: #{tpu_custom_call.1} parent=1 // pred_region
      _
    $region5: #{tpu_custom_call.1} parent=1 // pred_fallthru
      _
    // Predicated region
    $region6: #{tpu_custom_call.1} parent=1 // pred_check
      _
    $region7: #{tpu_custom_call.1} parent=1 // pred_check_branch
      %13 = sbr.rel (0) target = $region9
    $region8: #{tpu_custom_call.1} parent=1 // pred_region
      _
    $region9: #{tpu_custom_call.1} parent=1 // pred_fallthru
      _
    // Predicated region
    $region10: #{tpu_custom_call.1} parent=1 // pred_check
      _
    $region11: #{tpu_custom_call.1} parent=1 // pred_check_branch
      %15 = sbr.rel (0) target = $region13
    $region12: #{tpu_custom_call.1} parent=1 // pred_region
      _
    $region13: #{tpu_custom_call.1} parent=1 // pred_fallthru
      _
    // Predicated region
    $region14: #{tpu_custom_call.1} parent=1 // pred_check
      _
    $region15: #{tpu_custom_call.1} parent=1 // pred_check_branch
      %17 = sbr.rel (0) target = $region17
    $region16: #{tpu_custom_call.1} parent=1 // pred_region
      _
    $region17: #{tpu_custom_call.1} parent=1 // pred_fallthru
      _
    %v19 = vld [vmem:[%s0] sm:$0xf]
    %v20 = vld [vmem:[%s0 + $0x4] sm:$0xf]
    %v21 = vld [vmem:[%s0 + $0x8] sm:$0xf]
    %v22 = vld [vmem:[%s0 + $0xc] sm:$0xf]
    %v23 = vld [vmem:[%s0 + $0x10] sm:$0xf]
    %v24 = vld [vmem:[%s0 + $0x14] sm:$0xf]
    %v25 = vld [vmem:[%s0 + $0x18] sm:$0xf]
    %v26 = vld [vmem:[%s0 + $0x1c] sm:$0xf]
    %v27 = vld [vmem:[%s0 + $0x20] sm:$0xf]
    %v28 = vld [vmem:[%s0 + $0x24] sm:$0xf]
    %v29 = vld [vmem:[%s0 + $0x28] sm:$0xf]
    %v30 = vld [vmem:[%s0 + $0x2c] sm:$0xf]
    %v31 = vld [vmem:[%s0 + $0x30] sm:$0xf]
    %v32 = vld [vmem:[%s0 + $0x34] sm:$0xf]
    %v33 = vld [vmem:[%s0 + $0x38] sm:$0xf]
    %v34 = vld [vmem:[%s0 + $0x3c] sm:$0xf]
    %v35 = vld [vmem:[%s0 + $0x40] sm:$0xf]
    %v36 = vld [vmem:[%s0 + $0x44] sm:$0xf]
    %v37 = vld [vmem:[%s0 + $0x48] sm:$0xf]
    %v38 = vld [vmem:[%s0 + $0x4c] sm:$0xf]
    %v39 = vld [vmem:[%s0 + $0x50] sm:$0xf]
    %v40 = vld [vmem:[%s0 + $0x54] sm:$0xf]
    %v41 = vld [vmem:[%s0 + $0x58] sm:$0xf]
    %v42 = vld [vmem:[%s0 + $0x5c] sm:$0xf]
    %v43 = vld [vmem:[%s0 + $0x60] sm:$0xf]
    %v44 = vld [vmem:[%s0 + $0x64] sm:$0xf]
    %v45 = vld [vmem:[%s0 + $0x68] sm:$0xf]
    %v46 = vld [vmem:[%s0 + $0x6c] sm:$0xf]
    %v47 = vld [vmem:[%s0 + $0x70] sm:$0xf]
    %v48 = vld [vmem:[%s0 + $0x74] sm:$0xf]
    %v49 = vld [vmem:[%s0 + $0x78] sm:$0xf]
    %v50 = vld [vmem:[%s0 + $0x7c] sm:$0xf]
    %v51 = vld [vmem:[%s0 + $0x80] sm:$0xf]
    %v52 = vld [vmem:[%s0 + $0x84] sm:$0xf]
    %v53 = vld [vmem:[%s0 + $0x88] sm:$0xf]
    %v54 = vld [vmem:[%s0 + $0x8c] sm:$0xf]
    %v55 = vld [vmem:[%s0 + $0x90] sm:$0xf]
    %v56 = vld [vmem:[%s0 + $0x94] sm:$0xf]
    %v57 = vld [vmem:[%s0 + $0x98] sm:$0xf]
    %v58 = vld [vmem:[%s0 + $0x9c] sm:$0xf]
    %v59 = vld [vmem:[%s0 + $0xa0] sm:$0xf]
    %v60 = vld [vmem:[%s0 + $0xa4] sm:$0xf]
    %v61 = vld [vmem:[%s0 + $0xa8] sm:$0xf]
    %v62 = vld [vmem:[%s0 + $0xac] sm:$0xf]
    %v63 = vld [vmem:[%s0 + $0xb0] sm:$0xf]
    %v64 = vld [vmem:[%s0 + $0xb4] sm:$0xf]
    %v65 = vld [vmem:[%s0 + $0xb8] sm:$0xf]
    %v66 = vld [vmem:[%s0 + $0xbc] sm:$0xf]
    %v67 = vld [vmem:[%s0 + $0xc0] sm:$0xf]
    %v68 = vld [vmem:[%s0 + $0xc4] sm:$0xf]
    %v69 = vld [vmem:[%s0 + $0xc8] sm:$0xf]
    %v70 = vld [vmem:[%s0 + $0xcc] sm:$0xf]
    %v71 = vld [vmem:[%s0 + $0xd0] sm:$0xf]
    %v72 = vld [vmem:[%s0 + $0xd4] sm:$0xf]
    %v73 = vld [vmem:[%s0 + $0xd8] sm:$0xf]
    %v74 = vld [vmem:[%s0 + $0xdc] sm:$0xf]
    %v75 = vld [vmem:[%s0 + $0xe0] sm:$0xf]
    %v76 = vld [vmem:[%s0 + $0xe4] sm:$0xf]
    %v77 = vld [vmem:[%s0 + $0xe8] sm:$0xf]
    %v78 = vld [vmem:[%s0 + $0xec] sm:$0xf]
    %v79 = vld [vmem:[%s0 + $0xf0] sm:$0xf]
    %v80 = vld [vmem:[%s0 + $0xf4] sm:$0xf]
    %v81 = vld [vmem:[%s0 + $0xf8] sm:$0xf]
    %v82 = vld [vmem:[%s0 + $0xfc] sm:$0xf]
    %v83 = vld [vmem:[%s0 + $0x100] sm:$0xf]
    %v84 = vld [vmem:[%s0 + $0x104] sm:$0xf]
    %v85 = vld [vmem:[%s0 + $0x108] sm:$0xf]
    %v86 = vld [vmem:[%s0 + $0x10c] sm:$0xf]
    %v87 = vld [vmem:[%s0 + $0x110] sm:$0xf]
    %v88 = vld [vmem:[%s0 + $0x114] sm:$0xf]
    %v89 = vld [vmem:[%s0 + $0x118] sm:$0xf]
    %v90 = vld [vmem:[%s0 + $0x11c] sm:$0xf]
    %v91 = vld [vmem:[%s0 + $0x120] sm:$0xf]
    %v92 = vld [vmem:[%s0 + $0x124] sm:$0xf]
    %v93 = vld [vmem:[%s0 + $0x128] sm:$0xf]
    %v94 = vld [vmem:[%s0 + $0x12c] sm:$0xf]
    %v95 = vld [vmem:[%s0 + $0x130] sm:$0xf]
    %v96 = vld [vmem:[%s0 + $0x134] sm:$0xf]
    %v97 = vld [vmem:[%s0 + $0x138] sm:$0xf]
    %v98 = vld [vmem:[%s0 + $0x13c] sm:$0xf]
    %v99 = vld [vmem:[%s0 + $0x140] sm:$0xf]
    %v100 = vld [vmem:[%s0 + $0x144] sm:$0xf]
    %v101 = vld [vmem:[%s0 + $0x148] sm:$0xf]
    %v102 = vld [vmem:[%s0 + $0x14c] sm:$0xf]
    %v103 = vld [vmem:[%s0 + $0x150] sm:$0xf]
    %v104 = vld [vmem:[%s0 + $0x154] sm:$0xf]
    %v105 = vld [vmem:[%s0 + $0x158] sm:$0xf]
    %v106 = vld [vmem:[%s0 + $0x15c] sm:$0xf]
    %v107 = vld [vmem:[%s0 + $0x160] sm:$0xf]
    %v108 = vld [vmem:[%s0 + $0x164] sm:$0xf]
    %v109 = vld [vmem:[%s0 + $0x168] sm:$0xf]
    %v110 = vld [vmem:[%s0 + $0x16c] sm:$0xf]
    %v111 = vld [vmem:[%s0 + $0x170] sm:$0xf]
    %v112 = vld [vmem:[%s0 + $0x174] sm:$0xf]
    %v113 = vld [vmem:[%s0 + $0x178] sm:$0xf]
    %v114 = vld [vmem:[%s0 + $0x17c] sm:$0xf]
    %v115 = vld [vmem:[%s0 + $0x180] sm:$0xf]
    %v116 = vld [vmem:[%s0 + $0x184] sm:$0xf]
    %v117 = vld [vmem:[%s0 + $0x188] sm:$0xf]
    %v118 = vld [vmem:[%s0 + $0x18c] sm:$0xf]
    %v119 = vld [vmem:[%s0 + $0x190] sm:$0xf]
    %v120 = vld [vmem:[%s0 + $0x194] sm:$0xf]
    %v121 = vld [vmem:[%s0 + $0x198] sm:$0xf]
    %v122 = vld [vmem:[%s0 + $0x19c] sm:$0xf]
    %v123 = vld [vmem:[%s0 + $0x1a0] sm:$0xf]
    %v124 = vld [vmem:[%s0 + $0x1a4] sm:$0xf]
    %v125 = vld [vmem:[%s0 + $0x1a8] sm:$0xf]
    %v126 = vld [vmem:[%s0 + $0x1ac] sm:$0xf]
    %v127 = vld [vmem:[%s0 + $0x1b0] sm:$0xf]
    %v128 = vld [vmem:[%s0 + $0x1b4] sm:$0xf]
    %v129 = vld [vmem:[%s0 + $0x1b8] sm:$0xf]
    %v130 = vld [vmem:[%s0 + $0x1bc] sm:$0xf]
    %v131 = vld [vmem:[%s0 + $0x1c0] sm:$0xf]
    %v132 = vld [vmem:[%s0 + $0x1c4] sm:$0xf]
    %v133 = vld [vmem:[%s0 + $0x1c8] sm:$0xf]
    %v134 = vld [vmem:[%s0 + $0x1cc] sm:$0xf]
    %v135 = vld [vmem:[%s0 + $0x1d0] sm:$0xf]
    %v136 = vld [vmem:[%s0 + $0x1d4] sm:$0xf]
    %v137 = vld [vmem:[%s0 + $0x1d8] sm:$0xf]
    %v138 = vld [vmem:[%s0 + $0x1dc] sm:$0xf]
    %v139 = vld [vmem:[%s0 + $0x1e0] sm:$0xf]
    %v140 = vld [vmem:[%s0 + $0x1e4] sm:$0xf]
    %v141 = vld [vmem:[%s0 + $0x1e8] sm:$0xf]
    %v142 = vld [vmem:[%s0 + $0x1ec] sm:$0xf]
    %v143 = vld [vmem:[%s0 + $0x1f0] sm:$0xf]
    %v144 = vld [vmem:[%s0 + $0x1f4] sm:$0xf]
    %v145 = vld [vmem:[%s0 + $0x1f8] sm:$0xf]
    %v146 = vld [vmem:[%s0 + $0x1fc] sm:$0xf]
    %v147 = vld [vmem:[%s0 + $0x200] sm:$0xf]
    %v148 = vld [vmem:[%s0 + $0x204] sm:$0xf]
    %v149 = vld [vmem:[%s0 + $0x208] sm:$0xf]
    %v150 = vld [vmem:[%s0 + $0x20c] sm:$0xf]
    %v151 = vld [vmem:[%s0 + $0x210] sm:$0xf]
    %v152 = vld [vmem:[%s0 + $0x214] sm:$0xf]
    %v153 = vld [vmem:[%s0 + $0x218] sm:$0xf]
    %v154 = vld [vmem:[%s0 + $0x21c] sm:$0xf]
    %v155 = vld [vmem:[%s0 + $0x220] sm:$0xf]
    %v156 = vld [vmem:[%s0 + $0x224] sm:$0xf]
    %v157 = vld [vmem:[%s0 + $0x228] sm:$0xf]
    %v158 = vld [vmem:[%s0 + $0x22c] sm:$0xf]
    %v159 = vld [vmem:[%s0 + $0x230] sm:$0xf]
    %v160 = vld [vmem:[%s0 + $0x234] sm:$0xf]
    %v161 = vld [vmem:[%s0 + $0x238] sm:$0xf]
    %v162 = vld [vmem:[%s0 + $0x23c] sm:$0xf]
    %v163 = vld [vmem:[%s0 + $0x240] sm:$0xf]
    %v164 = vld [vmem:[%s0 + $0x244] sm:$0xf]
    %v165 = vld [vmem:[%s0 + $0x248] sm:$0xf]
    %v166 = vld [vmem:[%s0 + $0x24c] sm:$0xf]
    %v167 = vld [vmem:[%s0 + $0x250] sm:$0xf]
    %v168 = vld [vmem:[%s0 + $0x254] sm:$0xf]
    %v169 = vld [vmem:[%s0 + $0x258] sm:$0xf]
    %v170 = vld [vmem:[%s0 + $0x25c] sm:$0xf]
    %v171 = vld [vmem:[%s0 + $0x260] sm:$0xf]
    %v172 = vld [vmem:[%s0 + $0x264] sm:$0xf]
    %v173 = vld [vmem:[%s0 + $0x268] sm:$0xf]
    %v174 = vld [vmem:[%s0 + $0x26c] sm:$0xf]
    %v175 = vld [vmem:[%s0 + $0x270] sm:$0xf]
    %v176 = vld [vmem:[%s0 + $0x274] sm:$0xf]
    %v177 = vld [vmem:[%s0 + $0x278] sm:$0xf]
    %v178 = vld [vmem:[%s0 + $0x27c] sm:$0xf]
    %v179 = vld [vmem:[%s0 + $0x280] sm:$0xf]
    %v180 = vld [vmem:[%s0 + $0x284] sm:$0xf]
    %v181 = vld [vmem:[%s0 + $0x288] sm:$0xf]
    %v182 = vld [vmem:[%s0 + $0x28c] sm:$0xf]
    %v183 = vld [vmem:[%s0 + $0x290] sm:$0xf]
    %v184 = vld [vmem:[%s0 + $0x294] sm:$0xf]
    %v185 = vld [vmem:[%s0 + $0x298] sm:$0xf]
    %v186 = vld [vmem:[%s0 + $0x29c] sm:$0xf]
    %v187 = vld [vmem:[%s0 + $0x2a0] sm:$0xf]
    %v188 = vld [vmem:[%s0 + $0x2a4] sm:$0xf]
    %v189 = vld [vmem:[%s0 + $0x2a8] sm:$0xf]
    %v190 = vld [vmem:[%s0 + $0x2ac] sm:$0xf]
    %v191 = vld [vmem:[%s0 + $0x2b0] sm:$0xf]
    %v192 = vld [vmem:[%s0 + $0x2b4] sm:$0xf]
    %v193 = vld [vmem:[%s0 + $0x2b8] sm:$0xf]
    %v194 = vld [vmem:[%s0 + $0x2bc] sm:$0xf]
    %v195 = vld [vmem:[%s0 + $0x2c0] sm:$0xf]
    %v196 = vld [vmem:[%s0 + $0x2c4] sm:$0xf]
    %v197 = vld [vmem:[%s0 + $0x2c8] sm:$0xf]
    %v198 = vld [vmem:[%s0 + $0x2cc] sm:$0xf]
    %v199 = vld [vmem:[%s0 + $0x2d0] sm:$0xf]
    %v200 = vld [vmem:[%s0 + $0x2d4] sm:$0xf]
    %v201 = vld [vmem:[%s0 + $0x2d8] sm:$0xf]
    %v202 = vld [vmem:[%s0 + $0x2dc] sm:$0xf]
    %v203 = vld [vmem:[%s0 + $0x2e0] sm:$0xf]
    %v204 = vld [vmem:[%s0 + $0x2e4] sm:$0xf]
    %v205 = vld [vmem:[%s0 + $0x2e8] sm:$0xf]
    %v206 = vld [vmem:[%s0 + $0x2ec] sm:$0xf]
    %v207 = vld [vmem:[%s0 + $0x2f0] sm:$0xf]
    %v208 = vld [vmem:[%s0 + $0x2f4] sm:$0xf]
    %v209 = vld [vmem:[%s0 + $0x2f8] sm:$0xf]
    %v210 = vld [vmem:[%s0 + $0x2fc] sm:$0xf]
    %v211 = vld [vmem:[%s0 + $0x300] sm:$0xf]
    %v212 = vld [vmem:[%s0 + $0x304] sm:$0xf]
    %v213 = vld [vmem:[%s0 + $0x308] sm:$0xf]
    %v214 = vld [vmem:[%s0 + $0x30c] sm:$0xf]
    %v215 = vld [vmem:[%s1] sm:$0xf]
    %v216 = vld [vmem:[%s1 + $0x4] sm:$0xf]
    %v217 = vld [vmem:[%s1 + $0x8] sm:$0xf]
    %v218 = vld [vmem:[%s1 + $0xc] sm:$0x3]
    %v415 = vunpack.c.l.b16 %v19
    %v416 = vunpack.c.l.b16 %v20
    %v417 = vunpack.c.l.b16 %v21
    %v418 = vunpack.c.l.b16 %v22
    %v419 = vunpack.c.l.b16 %v23
    %v420 = vunpack.c.l.b16 %v24
    %v421 = vunpack.c.l.b16 %v25
    %v422 = vunpack.c.l.b16 %v26
    %v423 = vunpack.c.l.b16 %v27
    %v424 = vunpack.c.l.b16 %v28
    %v425 = vunpack.c.l.b16 %v29
    %v426 = vunpack.c.l.b16 %v30
    %v427 = vunpack.c.l.b16 %v31
    %v428 = vunpack.c.l.b16 %v32
    %v429 = vunpack.c.l.b16 %v33
    %v430 = vunpack.c.l.b16 %v34
    %v431 = vunpack.c.l.b16 %v35
    %v432 = vunpack.c.l.b16 %v36
    %v433 = vunpack.c.l.b16 %v37
    %v434 = vunpack.c.l.b16 %v38
    %v435 = vunpack.c.l.b16 %v39
    %v436 = vunpack.c.l.b16 %v40
    %v437 = vunpack.c.l.b16 %v41
    %v438 = vunpack.c.l.b16 %v42
    %v439 = vunpack.c.l.b16 %v43
    %v440 = vunpack.c.l.b16 %v44
    %v441 = vunpack.c.l.b16 %v45
    %v442 = vunpack.c.l.b16 %v46
    %v443 = vunpack.c.l.b16 %v47
    %v444 = vunpack.c.l.b16 %v48
    %v445 = vunpack.c.l.b16 %v49
    %v446 = vunpack.c.l.b16 %v50
    %v447 = vunpack.c.l.b16 %v51
    %v448 = vunpack.c.l.b16 %v52
    %v449 = vunpack.c.l.b16 %v53
    %v450 = vunpack.c.l.b16 %v54
    %v451 = vunpack.c.l.b16 %v55
    %v452 = vunpack.c.l.b16 %v56
    %v453 = vunpack.c.l.b16 %v57
    %v454 = vunpack.c.l.b16 %v58
    %v455 = vunpack.c.l.b16 %v59
    %v456 = vunpack.c.l.b16 %v60
    %v457 = vunpack.c.l.b16 %v61
    %v458 = vunpack.c.l.b16 %v62
    %v459 = vunpack.c.l.b16 %v63
    %v460 = vunpack.c.l.b16 %v64
    %v461 = vunpack.c.l.b16 %v65
    %v462 = vunpack.c.l.b16 %v66
    %v463 = vunpack.c.l.b16 %v67
    %v464 = vunpack.c.l.b16 %v68
    %v465 = vunpack.c.l.b16 %v69
    %v466 = vunpack.c.l.b16 %v70
    %v467 = vunpack.c.l.b16 %v71
    %v468 = vunpack.c.l.b16 %v72
    %v469 = vunpack.c.l.b16 %v73
    %v470 = vunpack.c.l.b16 %v74
    %v471 = vunpack.c.l.b16 %v75
    %v472 = vunpack.c.l.b16 %v76
    %v473 = vunpack.c.l.b16 %v77
    %v474 = vunpack.c.l.b16 %v78
    %v475 = vunpack.c.l.b16 %v79
    %v476 = vunpack.c.l.b16 %v80
    %v477 = vunpack.c.l.b16 %v81
    %v478 = vunpack.c.l.b16 %v82
    %v479 = vunpack.c.l.b16 %v83
    %v480 = vunpack.c.l.b16 %v84
    %v481 = vunpack.c.l.b16 %v85
    %v482 = vunpack.c.l.b16 %v86
    %v483 = vunpack.c.l.b16 %v87
    %v484 = vunpack.c.l.b16 %v88
    %v485 = vunpack.c.l.b16 %v89
    %v486 = vunpack.c.l.b16 %v90
    %v487 = vunpack.c.l.b16 %v91
    %v488 = vunpack.c.l.b16 %v92
    %v489 = vunpack.c.l.b16 %v93
    %v490 = vunpack.c.l.b16 %v94
    %v491 = vunpack.c.l.b16 %v95
    %v492 = vunpack.c.l.b16 %v96
    %v493 = vunpack.c.l.b16 %v97
    %v494 = vunpack.c.l.b16 %v98
    %v495 = vunpack.c.l.b16 %v99
    %v496 = vunpack.c.l.b16 %v100
    %v497 = vunpack.c.l.b16 %v101
    %v498 = vunpack.c.l.b16 %v102
    %v499 = vunpack.c.l.b16 %v103
    %v500 = vunpack.c.l.b16 %v104
    %v501 = vunpack.c.l.b16 %v105
    %v502 = vunpack.c.l.b16 %v106
    %v503 = vunpack.c.l.b16 %v107
    %v504 = vunpack.c.l.b16 %v108
    %v505 = vunpack.c.l.b16 %v109
    %v506 = vunpack.c.l.b16 %v110
    %v507 = vunpack.c.l.b16 %v111
    %v508 = vunpack.c.l.b16 %v112
    %v509 = vunpack.c.l.b16 %v113
    %v510 = vunpack.c.l.b16 %v114
    %v511 = vunpack.c.l.b16 %v115
    %v512 = vunpack.c.l.b16 %v116
    %v513 = vunpack.c.l.b16 %v117
    %v514 = vunpack.c.l.b16 %v118
    %v515 = vunpack.c.l.b16 %v119
    %v516 = vunpack.c.l.b16 %v120
    %v517 = vunpack.c.l.b16 %v121
    %v518 = vunpack.c.l.b16 %v122
    %v519 = vunpack.c.l.b16 %v123
    %v520 = vunpack.c.l.b16 %v124
    %v521 = vunpack.c.l.b16 %v125
    %v522 = vunpack.c.l.b16 %v126
    %v523 = vunpack.c.l.b16 %v127
    %v524 = vunpack.c.l.b16 %v128
    %v525 = vunpack.c.l.b16 %v129
    %v526 = vunpack.c.l.b16 %v130
    %v527 = vunpack.c.l.b16 %v131
    %v528 = vunpack.c.l.b16 %v132
    %v529 = vunpack.c.l.b16 %v133
    %v530 = vunpack.c.l.b16 %v134
    %v531 = vunpack.c.l.b16 %v135
    %v532 = vunpack.c.l.b16 %v136
    %v533 = vunpack.c.l.b16 %v137
    %v534 = vunpack.c.l.b16 %v138
    %v535 = vunpack.c.l.b16 %v139
    %v536 = vunpack.c.l.b16 %v140
    %v537 = vunpack.c.l.b16 %v141
    %v538 = vunpack.c.l.b16 %v142
    %v539 = vunpack.c.l.b16 %v143
    %v540 = vunpack.c.l.b16 %v144
    %v541 = vunpack.c.l.b16 %v145
    %v542 = vunpack.c.l.b16 %v146
    %v543 = vunpack.c.l.b16 %v147
    %v544 = vunpack.c.l.b16 %v148
    %v545 = vunpack.c.l.b16 %v149
    %v546 = vunpack.c.l.b16 %v150
    %v547 = vunpack.c.l.b16 %v151
    %v548 = vunpack.c.l.b16 %v152
    %v549 = vunpack.c.l.b16 %v153
    %v550 = vunpack.c.l.b16 %v154
    %v551 = vunpack.c.l.b16 %v155
    %v552 = vunpack.c.l.b16 %v156
    %v553 = vunpack.c.l.b16 %v157
    %v554 = vunpack.c.l.b16 %v158
    %v555 = vunpack.c.l.b16 %v159
    %v556 = vunpack.c.l.b16 %v160
    %v557 = vunpack.c.l.b16 %v161
    %v558 = vunpack.c.l.b16 %v162
    %v559 = vunpack.c.l.b16 %v163
    %v560 = vunpack.c.l.b16 %v164
    %v561 = vunpack.c.l.b16 %v165
    %v562 = vunpack.c.l.b16 %v166
    %v563 = vunpack.c.l.b16 %v167
    %v564 = vunpack.c.l.b16 %v168
    %v565 = vunpack.c.l.b16 %v169
    %v566 = vunpack.c.l.b16 %v170
    %v567 = vunpack.c.l.b16 %v171
    %v568 = vunpack.c.l.b16 %v172
    %v569 = vunpack.c.l.b16 %v173
    %v570 = vunpack.c.l.b16 %v174
    %v571 = vunpack.c.l.b16 %v175
    %v572 = vunpack.c.l.b16 %v176
    %v573 = vunpack.c.l.b16 %v177
    %v574 = vunpack.c.l.b16 %v178
    %v575 = vunpack.c.l.b16 %v179
    %v576 = vunpack.c.l.b16 %v180
    %v577 = vunpack.c.l.b16 %v181
    %v578 = vunpack.c.l.b16 %v182
    %v579 = vunpack.c.l.b16 %v183
    %v580 = vunpack.c.l.b16 %v184
    %v581 = vunpack.c.l.b16 %v185
    %v582 = vunpack.c.l.b16 %v186
    %v583 = vunpack.c.l.b16 %v187
    %v584 = vunpack.c.l.b16 %v188
    %v585 = vunpack.c.l.b16 %v189
    %v586 = vunpack.c.l.b16 %v190
    %v587 = vunpack.c.l.b16 %v191
    %v588 = vunpack.c.l.b16 %v192
    %v589 = vunpack.c.l.b16 %v193
    %v590 = vunpack.c.l.b16 %v194
    %v591 = vunpack.c.l.b16 %v195
    %v592 = vunpack.c.l.b16 %v196
    %v593 = vunpack.c.l.b16 %v197
    %v594 = vunpack.c.l.b16 %v198
    %v595 = vunpack.c.l.b16 %v199
    %v596 = vunpack.c.l.b16 %v200
    %v597 = vunpack.c.l.b16 %v201
    %v598 = vunpack.c.l.b16 %v202
    %v599 = vunpack.c.l.b16 %v203
    %v600 = vunpack.c.l.b16 %v204
    %v601 = vunpack.c.l.b16 %v205
    %v602 = vunpack.c.l.b16 %v206
    %v603 = vunpack.c.l.b16 %v207
    %v604 = vunpack.c.l.b16 %v208
    %v605 = vunpack.c.l.b16 %v209
    %v606 = vunpack.c.l.b16 %v210
    %v607 = vunpack.c.l.b16 %v211
    %v608 = vunpack.c.l.b16 %v212
    %v609 = vunpack.c.l.b16 %v213
    %v610 = vunpack.c.l.b16 %v214
    %v611 = vpack.c.b16 %v416, %v415
    %v612 = vpack.c.b16 %v418, %v417
    %v613 = vpack.c.b16 %v420, %v419
    %v614 = vpack.c.b16 %v422, %v421
    %v615 = vpack.c.b16 %v424, %v423
    %v616 = vpack.c.b16 %v426, %v425
    %v617 = vpack.c.b16 %v428, %v427
    %v618 = vpack.c.b16 %v430, %v429
    %v619 = vpack.c.b16 %v432, %v431
    %v620 = vpack.c.b16 %v434, %v433
    %v621 = vpack.c.b16 %v436, %v435
    %v622 = vpack.c.b16 %v438, %v437
    %v623 = vpack.c.b16 %v440, %v439
    %v624 = vpack.c.b16 %v442, %v441
    %v625 = vpack.c.b16 %v444, %v443
    %v626 = vpack.c.b16 %v446, %v445
    %v627 = vpack.c.b16 %v448, %v447
    %v628 = vpack.c.b16 %v450, %v449
    %v629 = vpack.c.b16 %v452, %v451
    %v630 = vpack.c.b16 %v454, %v453
    %v631 = vpack.c.b16 %v456, %v455
    %v632 = vpack.c.b16 %v458, %v457
    %v633 = vpack.c.b16 %v460, %v459
    %v634 = vpack.c.b16 %v462, %v461
    %v635 = vpack.c.b16 %v464, %v463
    %v636 = vpack.c.b16 %v466, %v465
    %v637 = vpack.c.b16 %v468, %v467
    %v638 = vpack.c.b16 %v470, %v469
    %v639 = vpack.c.b16 %v472, %v471
    %v640 = vpack.c.b16 %v474, %v473
    %v641 = vpack.c.b16 %v476, %v475
    %v642 = vpack.c.b16 %v478, %v477
    %v643 = vpack.c.b16 %v480, %v479
    %v644 = vpack.c.b16 %v482, %v481
    %v645 = vpack.c.b16 %v484, %v483
    %v646 = vpack.c.b16 %v486, %v485
    %v647 = vpack.c.b16 %v488, %v487
    %v648 = vpack.c.b16 %v490, %v489
    %v649 = vpack.c.b16 %v492, %v491
    %v650 = vpack.c.b16 %v494, %v493
    %v651 = vpack.c.b16 %v496, %v495
    %v652 = vpack.c.b16 %v498, %v497
    %v653 = vpack.c.b16 %v500, %v499
    %v654 = vpack.c.b16 %v502, %v501
    %v655 = vpack.c.b16 %v504, %v503
    %v656 = vpack.c.b16 %v506, %v505
    %v657 = vpack.c.b16 %v508, %v507
    %v658 = vpack.c.b16 %v510, %v509
    %v659 = vpack.c.b16 %v512, %v511
    %v660 = vpack.c.b16 %v514, %v513
    %v661 = vpack.c.b16 %v516, %v515
    %v662 = vpack.c.b16 %v518, %v517
    %v663 = vpack.c.b16 %v520, %v519
    %v664 = vpack.c.b16 %v522, %v521
    %v665 = vpack.c.b16 %v524, %v523
    %v666 = vpack.c.b16 %v526, %v525
    %v667 = vpack.c.b16 %v528, %v527
    %v668 = vpack.c.b16 %v530, %v529
    %v669 = vpack.c.b16 %v532, %v531
    %v670 = vpack.c.b16 %v534, %v533
    %v671 = vpack.c.b16 %v536, %v535
    %v672 = vpack.c.b16 %v538, %v537
    %v673 = vpack.c.b16 %v540, %v539
    %v674 = vpack.c.b16 %v542, %v541
    %v675 = vpack.c.b16 %v544, %v543
    %v676 = vpack.c.b16 %v546, %v545
    %v677 = vpack.c.b16 %v548, %v547
    %v678 = vpack.c.b16 %v550, %v549
    %v679 = vpack.c.b16 %v552, %v551
    %v680 = vpack.c.b16 %v554, %v553
    %v681 = vpack.c.b16 %v556, %v555
    %v682 = vpack.c.b16 %v558, %v557
    %v683 = vpack.c.b16 %v560, %v559
    %v684 = vpack.c.b16 %v562, %v561
    %v685 = vpack.c.b16 %v564, %v563
    %v686 = vpack.c.b16 %v566, %v565
    %v687 = vpack.c.b16 %v568, %v567
    %v688 = vpack.c.b16 %v570, %v569
    %v689 = vpack.c.b16 %v572, %v571
    %v690 = vpack.c.b16 %v574, %v573
    %v691 = vpack.c.b16 %v576, %v575
    %v692 = vpack.c.b16 %v578, %v577
    %v693 = vpack.c.b16 %v580, %v579
    %v694 = vpack.c.b16 %v582, %v581
    %v695 = vpack.c.b16 %v584, %v583
    %v696 = vpack.c.b16 %v586, %v585
    %v697 = vpack.c.b16 %v588, %v587
    %v698 = vpack.c.b16 %v590, %v589
    %v699 = vpack.c.b16 %v592, %v591
    %v700 = vpack.c.b16 %v594, %v593
    %v701 = vpack.c.b16 %v596, %v595
    %v702 = vpack.c.b16 %v598, %v597
    %v703 = vpack.c.b16 %v600, %v599
    %v704 = vpack.c.b16 %v602, %v601
    %v705 = vpack.c.b16 %v604, %v603
    %v706 = vpack.c.b16 %v606, %v605
    %v707 = vpack.c.b16 %v608, %v607
    %v708 = vpack.c.b16 %v610, %v609
    %v713 = vunpack.c.l.b16 %v215
    %v714 = vunpack.c.l.b16 %v216
    %v715 = vunpack.c.l.b16 %v217
    %v716 = vunpack.c.l.b16 %v218
    %v717 = vpack.c.b16 %v714, %v713
    %v718 = vpack.c.b16 %v716, %v715
    %vm720 = vcmask 220160
    %v722 = vsel %vm720, %v611, 0
    %v725 = vsel %vm720, %v612, 0
    %v728 = vsel %vm720, %v613, 0
    %v731 = vsel %vm720, %v614, 0
    %v734 = vsel %vm720, %v615, 0
    %v737 = vsel %vm720, %v616, 0
    %v740 = vsel %vm720, %v617, 0
    %v743 = vsel %vm720, %v618, 0
    %v746 = vsel %vm720, %v619, 0
    %v749 = vsel %vm720, %v620, 0
    %v752 = vsel %vm720, %v621, 0
    %v755 = vsel %vm720, %v622, 0
    %v758 = vsel %vm720, %v623, 0
    %v761 = vsel %vm720, %v624, 0
    %v764 = vsel %vm720, %v625, 0
    %v767 = vsel %vm720, %v626, 0
    %v770 = vsel %vm720, %v627, 0
    %v773 = vsel %vm720, %v628, 0
    %v776 = vsel %vm720, %v629, 0
    %v779 = vsel %vm720, %v630, 0
    %v782 = vsel %vm720, %v631, 0
    %v785 = vsel %vm720, %v632, 0
    %v788 = vsel %vm720, %v633, 0
    %v791 = vsel %vm720, %v634, 0
    %v794 = vsel %vm720, %v635, 0
    %v797 = vsel %vm720, %v636, 0
    %v800 = vsel %vm720, %v637, 0
    %v803 = vsel %vm720, %v638, 0
    %v806 = vsel %vm720, %v639, 0
    %v809 = vsel %vm720, %v640, 0
    %v812 = vsel %vm720, %v641, 0
    %v815 = vsel %vm720, %v642, 0
    %v818 = vsel %vm720, %v643, 0
    %v821 = vsel %vm720, %v644, 0
    %v824 = vsel %vm720, %v645, 0
    %v827 = vsel %vm720, %v646, 0
    %v830 = vsel %vm720, %v647, 0
    %v833 = vsel %vm720, %v648, 0
    %v836 = vsel %vm720, %v649, 0
    %v839 = vsel %vm720, %v650, 0
    %v842 = vsel %vm720, %v651, 0
    %v845 = vsel %vm720, %v652, 0
    %v848 = vsel %vm720, %v653, 0
    %v851 = vsel %vm720, %v654, 0
    %v854 = vsel %vm720, %v655, 0
    %v857 = vsel %vm720, %v656, 0
    %v860 = vsel %vm720, %v657, 0
    %v863 = vsel %vm720, %v658, 0
    %v866 = vsel %vm720, %v659, 0
    %v869 = vsel %vm720, %v660, 0
    %v872 = vsel %vm720, %v661, 0
    %v875 = vsel %vm720, %v662, 0
    %v878 = vsel %vm720, %v663, 0
    %v881 = vsel %vm720, %v664, 0
    %v884 = vsel %vm720, %v665, 0
    %v887 = vsel %vm720, %v666, 0
    %v890 = vsel %vm720, %v667, 0
    %v893 = vsel %vm720, %v668, 0
    %v896 = vsel %vm720, %v669, 0
    %v899 = vsel %vm720, %v670, 0
    %v902 = vsel %vm720, %v671, 0
    %v905 = vsel %vm720, %v672, 0
    %v908 = vsel %vm720, %v673, 0
    %v911 = vsel %vm720, %v674, 0
    %v914 = vsel %vm720, %v675, 0
    %v917 = vsel %vm720, %v676, 0
    %v920 = vsel %vm720, %v677, 0
    %v923 = vsel %vm720, %v678, 0
    %v926 = vsel %vm720, %v679, 0
    %v929 = vsel %vm720, %v680, 0
    %v932 = vsel %vm720, %v681, 0
    %v935 = vsel %vm720, %v682, 0
    %v938 = vsel %vm720, %v683, 0
    %v941 = vsel %vm720, %v684, 0
    %v944 = vsel %vm720, %v685, 0
    %v947 = vsel %vm720, %v686, 0
    %v950 = vsel %vm720, %v687, 0
    %v953 = vsel %vm720, %v688, 0
    %v956 = vsel %vm720, %v689, 0
    %v959 = vsel %vm720, %v690, 0
    %v962 = vsel %vm720, %v691, 0
    %v965 = vsel %vm720, %v692, 0
    %v968 = vsel %vm720, %v693, 0
    %v971 = vsel %vm720, %v694, 0
    %v974 = vsel %vm720, %v695, 0
    %v977 = vsel %vm720, %v696, 0
    %v980 = vsel %vm720, %v697, 0
    %v983 = vsel %vm720, %v698, 0
    %v986 = vsel %vm720, %v699, 0
    %v989 = vsel %vm720, %v700, 0
    %v992 = vsel %vm720, %v701, 0
    %v995 = vsel %vm720, %v702, 0
    %v998 = vsel %vm720, %v703, 0
    %v1001 = vsel %vm720, %v704, 0
    %v1004 = vsel %vm720, %v705, 0
    %v1007 = vsel %vm720, %v706, 0
    %v1010 = vsel %vm720, %v707, 0
    %v1013 = vsel %vm720, %v708, 0
    %vm1015 = vcmask 1044480
    %vm1016 = vcmask 1045504
    %v1017 = vsel %vm1015, 4294967295, 65535
    %v1018 = vsel %vm1016, %v1017, 0
    %v1020 = vand.u32 %v718, %v1018
    %1022 = vmatprep.subr.bf16.mxu0 0
    %1023 = vmatpush1.bf16.msra.mxu0 %v717
    %1024 = vmatprep.subr.bf16.mxu0 0
    %1025 = vmatpush1.bf16.msra.mxu0 %v1020
    %1026 = vmatprep.subr.bf16.mxu0 0
    %1027 = vmatpush1.bf16.msra.mxu0 0
    %1028 = vmatprep.subr.bf16.mxu0 0
    %1029 = vmatpush1.bf16.msra.mxu0 0
    %1030 = vmatprep.subr.bf16.mxu0 0
    %1031 = vmatpush1.bf16.msra.mxu0 0
    %1032 = vmatprep.subr.bf16.mxu0 0
    %1033 = vmatpush1.bf16.msra.mxu0 0
    %1034 = vmatprep.subr.bf16.mxu0 0
    %1035 = vmatpush1.bf16.msra.mxu0 0
    %1036 = vmatprep.subr.bf16.mxu0 0
    %1037 = vmatpush1.bf16.msra.mxu0 0
    %1038 = vmatprep.subr.bf16.mxu0 0
    %1039 = vmatpush1.bf16.msra.mxu0 0
    %1040 = vmatprep.subr.bf16.mxu0 0
    %1041 = vmatpush1.bf16.msra.mxu0 0
    %1042 = vmatprep.subr.bf16.mxu0 0
    %1043 = vmatpush1.bf16.msra.mxu0 0
    %1044 = vmatprep.subr.bf16.mxu0 0
    %1045 = vmatpush1.bf16.msra.mxu0 0
    %1046 = vmatprep.subr.bf16.mxu0 0
    %1047 = vmatpush1.bf16.msra.mxu0 0
    %1048 = vmatprep.subr.bf16.mxu0 0
    %1049 = vmatpush1.bf16.msra.mxu0 0
    %1050 = vmatprep.subr.bf16.mxu0 0
    %1051 = vmatpush1.bf16.msra.mxu0 0
    %1052 = vmatprep.subr.bf16.mxu0 0
    %1053 = vmatpush1.bf16.msra.mxu0 0
    %1054 = vmatprep.mubr.bf16.mxu0 0
    %1055 = vmatmul.mubr.bf16.gmra.mrb[0].mxu0 %v722
    %v1056 = vpop.f32.mrb[0].mxu0
    %v1057 = vadd.f32 0.0, %v1056
    %v1058 = vpop.f32.mrb[0].mxu0
    %v1059 = vpop.f32.mrb[0].mxu0
    %v1060 = vadd.f32 0.0, %v1059
    %v1061 = vpop.f32.mrb[0].mxu0
    %1062 = vmatprep.mubr.bf16.mxu0 0
    %1063 = vmatmul.mubr.bf16.gmra.mrb[0].mxu0 %v725
    %v1064 = vpop.f32.mrb[0].mxu0
    %v1065 = vadd.f32 0.0, %v1064
    %v1066 = vpop.f32.mrb[0].mxu0
    %v1067 = vpop.f32.mrb[0].mxu0
    %v1068 = vadd.f32 0.0, %v1067
    %v1069 = vpop.f32.mrb[0].mxu0
    %1070 = vmatprep.mubr.bf16.mxu0 0
    %1071 = vmatmul.mubr.bf16.gmra.mrb[0].mxu0 %v728
    %v1072 = vpop.f32.mrb[0].mxu0
    %v1073 = vadd.f32 0.0, %v1072
    %v1074 = vpop.f32.mrb[0].mxu0
    %v1075 = vpop.f32.mrb[0].mxu0
    %v1076 = vadd.f32 0.0, %v1075
    %v1077 = vpop.f32.mrb[0].mxu0
    %1078 = vmatprep.mubr.bf16.mxu0 0
    %1079 = vmatmul.mubr.bf16.gmra.mrb[0].mxu0 %v731
    %v1080 = vpop.f32.mrb[0].mxu0
    %v1081 = vadd.f32 0.0, %v1080
    %v1082 = vpop.f32.mrb[0].mxu0
    %v1083 = vpop.f32.mrb[0].mxu0
    %v1084 = vadd.f32 0.0, %v1083
    %v1085 = vpop.f32.mrb[0].mxu0
    %1086 = vmatprep.mubr.bf16.mxu0 0
    %1087 = vmatmul.mubr.bf16.gmra.mrb[0].mxu0 %v734
    %v1088 = vpop.f32.mrb[0].mxu0
    %v1089 = vadd.f32 0.0, %v1088
    %v1090 = vpop.f32.mrb[0].mxu0
    %v1091 = vpop.f32.mrb[0].mxu0
    %v1092 = vadd.f32 0.0, %v1091
    %v1093 = vpop.f32.mrb[0].mxu0
    %1094 = vmatprep.mubr.bf16.mxu0 0
    %1095 = vmatmul.mubr.bf16.gmra.mrb[0].mxu0 %v737
    %v1096 = vpop.f32.mrb[0].mxu0
    %v1097 = vadd.f32 0.0, %v1096
    %v1098 = vpop.f32.mrb[0].mxu0
    %v1099 = vpop.f32.mrb[0].mxu0
    %v1100 = vadd.f32 0.0, %v1099
    %v1101 = vpop.f32.mrb[0].mxu0
    %1102 = vmatprep.mubr.bf16.mxu0 0
    %1103 = vmatmul.mubr.bf16.gmra.mrb[0].mxu0 %v740
    %v1104 = vpop.f32.mrb[0].mxu0
    %v1105 = vadd.f32 0.0, %v1104
    %v1106 = vpop.f32.mrb[0].mxu0
    %v1107 = vpop.f32.mrb[0].mxu0
    %v1108 = vadd.f32 0.0, %v1107
    %v1109 = vpop.f32.mrb[0].mxu0
    %1110 = vmatprep.mubr.bf16.mxu0 0
    %1111 = vmatmul.mubr.bf16.gmra.mrb[0].mxu0 %v743
    %v1112 = vpop.f32.mrb[0].mxu0
    %v1113 = vadd.f32 0.0, %v1112
    %v1114 = vpop.f32.mrb[0].mxu0
    %v1115 = vpop.f32.mrb[0].mxu0
    %v1116 = vadd.f32 0.0, %v1115
    %v1117 = vpop.f32.mrb[0].mxu0
    %1118 = vmatprep.mubr.bf16.mxu0 0
    %1119 = vmatmul.mubr.bf16.gmra.mrb[0].mxu0 %v746
    %v1120 = vpop.f32.mrb[0].mxu0
    %v1121 = vadd.f32 0.0, %v1120
    %v1122 = vpop.f32.mrb[0].mxu0
    %v1123 = vpop.f32.mrb[0].mxu0
    %v1124 = vadd.f32 0.0, %v1123
    %v1125 = vpop.f32.mrb[0].mxu0
    %1126 = vmatprep.mubr.bf16.mxu0 0
    %1127 = vmatmul.mubr.bf16.gmra.mrb[0].mxu0 %v749
    %v1128 = vpop.f32.mrb[0].mxu0
    %v1129 = vadd.f32 0.0, %v1128
    %v1130 = vpop.f32.mrb[0].mxu0
    %v1131 = vpop.f32.mrb[0].mxu0
    %v1132 = vadd.f32 0.0, %v1131
    %v1133 = vpop.f32.mrb[0].mxu0
    %1134 = vmatprep.mubr.bf16.mxu0 0
    %1135 = vmatmul.mubr.bf16.gmra.mrb[0].mxu0 %v752
    %v1136 = vpop.f32.mrb[0].mxu0
    %v1137 = vadd.f32 0.0, %v1136
    %v1138 = vpop.f32.mrb[0].mxu0
    %v1139 = vpop.f32.mrb[0].mxu0
    %v1140 = vadd.f32 0.0, %v1139
    %v1141 = vpop.f32.mrb[0].mxu0
    %1142 = vmatprep.mubr.bf16.mxu0 0
    %1143 = vmatmul.mubr.bf16.gmra.mrb[0].mxu0 %v755
    %v1144 = vpop.f32.mrb[0].mxu0
    %v1145 = vadd.f32 0.0, %v1144
    %v1146 = vpop.f32.mrb[0].mxu0
    %v1147 = vpop.f32.mrb[0].mxu0
    %v1148 = vadd.f32 0.0, %v1147
    %v1149 = vpop.f32.mrb[0].mxu0
    %1150 = vmatprep.mubr.bf16.mxu0 0
    %1151 = vmatmul.mubr.bf16.gmra.mrb[0].mxu0 %v758
    %v1152 = vpop.f32.mrb[0].mxu0
    %v1153 = vadd.f32 0.0, %v1152
    %v1154 = vpop.f32.mrb[0].mxu0
    %v1155 = vpop.f32.mrb[0].mxu0
    %v1156 = vadd.f32 0.0, %v1155
    %v1157 = vpop.f32.mrb[0].mxu0
    %1158 = vmatprep.mubr.bf16.mxu0 0
    %1159 = vmatmul.mubr.bf16.gmra.mrb[0].mxu0 %v761
    %v1160 = vpop.f32.mrb[0].mxu0
    %v1161 = vadd.f32 0.0, %v1160
    %v1162 = vpop.f32.mrb[0].mxu0
    %v1163 = vpop.f32.mrb[0].mxu0
    %v1164 = vadd.f32 0.0, %v1163
    %v1165 = vpop.f32.mrb[0].mxu0
    %1166 = vmatprep.mubr.bf16.mxu0 0
    %1167 = vmatmul.mubr.bf16.gmra.mrb[0].mxu0 %v764
    %v1168 = vpop.f32.mrb[0].mxu0
    %v1169 = vadd.f32 0.0, %v1168
    %v1170 = vpop.f32.mrb[0].mxu0
    %v1171 = vpop.f32.mrb[0].mxu0
    %v1172 = vadd.f32 0.0, %v1171
    %v1173 = vpop.f32.mrb[0].mxu0
    %1174 = vmatprep.mubr.bf16.mxu0 0
    %1175 = vmatmul.mubr.bf16.gmra.mrb[0].mxu0 %v767
    %v1176 = vpop.f32.mrb[0].mxu0
    %v1177 = vadd.f32 0.0, %v1176
    %v1178 = vpop.f32.mrb[0].mxu0
    %v1179 = vpop.f32.mrb[0].mxu0
    %v1180 = vadd.f32 0.0, %v1179
    %v1181 = vpop.f32.mrb[0].mxu0
    %1182 = vmatprep.mubr.bf16.mxu0 0
    %1183 = vmatmul.mubr.bf16.gmra.mrb[0].mxu0 %v770
    %v1184 = vpop.f32.mrb[0].mxu0
    %v1185 = vadd.f32 0.0, %v1184
    %v1186 = vpop.f32.mrb[0].mxu0
    %v1187 = vpop.f32.mrb[0].mxu0
    %v1188 = vadd.f32 0.0, %v1187
    %v1189 = vpop.f32.mrb[0].mxu0
    %1190 = vmatprep.mubr.bf16.mxu0 0
    %1191 = vmatmul.mubr.bf16.gmra.mrb[0].mxu0 %v773
    %v1192 = vpop.f32.mrb[0].mxu0
    %v1193 = vadd.f32 0.0, %v1192
    %v1194 = vpop.f32.mrb[0].mxu0
    %v1195 = vpop.f32.mrb[0].mxu0
    %v1196 = vadd.f32 0.0, %v1195
    %v1197 = vpop.f32.mrb[0].mxu0
    %1198 = vmatprep.mubr.bf16.mxu0 0
    %1199 = vmatmul.mubr.bf16.gmra.mrb[0].mxu0 %v776
    %v1200 = vpop.f32.mrb[0].mxu0
    %v1201 = vadd.f32 0.0, %v1200
    %v1202 = vpop.f32.mrb[0].mxu0
    %v1203 = vpop.f32.mrb[0].mxu0
    %v1204 = vadd.f32 0.0, %v1203
    %v1205 = vpop.f32.mrb[0].mxu0
    %1206 = vmatprep.mubr.bf16.mxu0 0
    %1207 = vmatmul.mubr.bf16.gmra.mrb[0].mxu0 %v779
    %v1208 = vpop.f32.mrb[0].mxu0
    %v1209 = vadd.f32 0.0, %v1208
    %v1210 = vpop.f32.mrb[0].mxu0
    %v1211 = vpop.f32.mrb[0].mxu0
    %v1212 = vadd.f32 0.0, %v1211
    %v1213 = vpop.f32.mrb[0].mxu0
    %1214 = vmatprep.mubr.bf16.mxu0 0
    %1215 = vmatmul.mubr.bf16.gmra.mrb[0].mxu0 %v782
    %v1216 = vpop.f32.mrb[0].mxu0
    %v1217 = vadd.f32 0.0, %v1216
    %v1218 = vpop.f32.mrb[0].mxu0
    %v1219 = vpop.f32.mrb[0].mxu0
    %v1220 = vadd.f32 0.0, %v1219
    %v1221 = vpop.f32.mrb[0].mxu0
    %1222 = vmatprep.mubr.bf16.mxu0 0
    %1223 = vmatmul.mubr.bf16.gmra.mrb[0].mxu0 %v785
    %v1224 = vpop.f32.mrb[0].mxu0
    %v1225 = vadd.f32 0.0, %v1224
    %v1226 = vpop.f32.mrb[0].mxu0
    %v1227 = vpop.f32.mrb[0].mxu0
    %v1228 = vadd.f32 0.0, %v1227
    %v1229 = vpop.f32.mrb[0].mxu0
    %1230 = vmatprep.mubr.bf16.mxu0 0
    %1231 = vmatmul.mubr.bf16.gmra.mrb[0].mxu0 %v788
    %v1232 = vpop.f32.mrb[0].mxu0
    %v1233 = vadd.f32 0.0, %v1232
    %v1234 = vpop.f32.mrb[0].mxu0
    %v1235 = vpop.f32.mrb[0].mxu0
    %v1236 = vadd.f32 0.0, %v1235
    %v1237 = vpop.f32.mrb[0].mxu0
    %1238 = vmatprep.mubr.bf16.mxu0 0
    %1239 = vmatmul.mubr.bf16.gmra.mrb[0].mxu0 %v791
    %v1240 = vpop.f32.mrb[0].mxu0
    %v1241 = vadd.f32 0.0, %v1240
    %v1242 = vpop.f32.mrb[0].mxu0
    %v1243 = vpop.f32.mrb[0].mxu0
    %v1244 = vadd.f32 0.0, %v1243
    %v1245 = vpop.f32.mrb[0].mxu0
    %1246 = vmatprep.mubr.bf16.mxu0 0
    %1247 = vmatmul.mubr.bf16.gmra.mrb[0].mxu0 %v794
    %v1248 = vpop.f32.mrb[0].mxu0
    %v1249 = vadd.f32 0.0, %v1248
    %v1250 = vpop.f32.mrb[0].mxu0
    %v1251 = vpop.f32.mrb[0].mxu0
    %v1252 = vadd.f32 0.0, %v1251
    %v1253 = vpop.f32.mrb[0].mxu0
    %1254 = vmatprep.mubr.bf16.mxu0 0
    %1255 = vmatmul.mubr.bf16.gmra.mrb[0].mxu0 %v797
    %v1256 = vpop.f32.mrb[0].mxu0
    %v1257 = vadd.f32 0.0, %v1256
    %v1258 = vpop.f32.mrb[0].mxu0
    %v1259 = vpop.f32.mrb[0].mxu0
    %v1260 = vadd.f32 0.0, %v1259
    %v1261 = vpop.f32.mrb[0].mxu0
    %1262 = vmatprep.mubr.bf16.mxu0 0
    %1263 = vmatmul.mubr.bf16.gmra.mrb[0].mxu0 %v800
    %v1264 = vpop.f32.mrb[0].mxu0
    %v1265 = vadd.f32 0.0, %v1264
    %v1266 = vpop.f32.mrb[0].mxu0
    %v1267 = vpop.f32.mrb[0].mxu0
    %v1268 = vadd.f32 0.0, %v1267
    %v1269 = vpop.f32.mrb[0].mxu0
    %1270 = vmatprep.mubr.bf16.mxu0 0
    %1271 = vmatmul.mubr.bf16.gmra.mrb[0].mxu0 %v803
    %v1272 = vpop.f32.mrb[0].mxu0
    %v1273 = vadd.f32 0.0, %v1272
    %v1274 = vpop.f32.mrb[0].mxu0
    %v1275 = vpop.f32.mrb[0].mxu0
    %v1276 = vadd.f32 0.0, %v1275
    %v1277 = vpop.f32.mrb[0].mxu0
    %1278 = vmatprep.mubr.bf16.mxu0 0
    %1279 = vmatmul.mubr.bf16.gmra.mrb[0].mxu0 %v806
    %v1280 = vpop.f32.mrb[0].mxu0
    %v1281 = vadd.f32 0.0, %v1280
    %v1282 = vpop.f32.mrb[0].mxu0
    %v1283 = vpop.f32.mrb[0].mxu0
    %v1284 = vadd.f32 0.0, %v1283
    %v1285 = vpop.f32.mrb[0].mxu0
    %1286 = vmatprep.mubr.bf16.mxu0 0
    %1287 = vmatmul.mubr.bf16.gmra.mrb[0].mxu0 %v809
    %v1288 = vpop.f32.mrb[0].mxu0
    %v1289 = vadd.f32 0.0, %v1288
    %v1290 = vpop.f32.mrb[0].mxu0
    %v1291 = vpop.f32.mrb[0].mxu0
    %v1292 = vadd.f32 0.0, %v1291
    %v1293 = vpop.f32.mrb[0].mxu0
    %1294 = vmatprep.mubr.bf16.mxu0 0
    %1295 = vmatmul.mubr.bf16.gmra.mrb[0].mxu0 %v812
    %v1296 = vpop.f32.mrb[0].mxu0
    %v1297 = vadd.f32 0.0, %v1296
    %v1298 = vpop.f32.mrb[0].mxu0
    %v1299 = vpop.f32.mrb[0].mxu0
    %v1300 = vadd.f32 0.0, %v1299
    %v1301 = vpop.f32.mrb[0].mxu0
    %1302 = vmatprep.mubr.bf16.mxu0 0
    %1303 = vmatmul.mubr.bf16.gmra.mrb[0].mxu0 %v815
    %v1304 = vpop.f32.mrb[0].mxu0
    %v1305 = vadd.f32 0.0, %v1304
    %v1306 = vpop.f32.mrb[0].mxu0
    %v1307 = vpop.f32.mrb[0].mxu0
    %v1308 = vadd.f32 0.0, %v1307
    %v1309 = vpop.f32.mrb[0].mxu0
    %1310 = vmatprep.mubr.bf16.mxu0 0
    %1311 = vmatmul.mubr.bf16.gmra.mrb[0].mxu0 %v818
    %v1312 = vpop.f32.mrb[0].mxu0
    %v1313 = vadd.f32 0.0, %v1312
    %v1314 = vpop.f32.mrb[0].mxu0
    %v1315 = vpop.f32.mrb[0].mxu0
    %v1316 = vadd.f32 0.0, %v1315
    %v1317 = vpop.f32.mrb[0].mxu0
    %1318 = vmatprep.mubr.bf16.mxu0 0
    %1319 = vmatmul.mubr.bf16.gmra.mrb[0].mxu0 %v821
    %v1320 = vpop.f32.mrb[0].mxu0
    %v1321 = vadd.f32 0.0, %v1320
    %v1322 = vpop.f32.mrb[0].mxu0
    %v1323 = vpop.f32.mrb[0].mxu0
    %v1324 = vadd.f32 0.0, %v1323
    %v1325 = vpop.f32.mrb[0].mxu0
    %1326 = vmatprep.mubr.bf16.mxu0 0
    %1327 = vmatmul.mubr.bf16.gmra.mrb[0].mxu0 %v824
    %v1328 = vpop.f32.mrb[0].mxu0
    %v1329 = vadd.f32 0.0, %v1328
    %v1330 = vpop.f32.mrb[0].mxu0
    %v1331 = vpop.f32.mrb[0].mxu0
    %v1332 = vadd.f32 0.0, %v1331
    %v1333 = vpop.f32.mrb[0].mxu0
    %1334 = vmatprep.mubr.bf16.mxu0 0
    %1335 = vmatmul.mubr.bf16.gmra.mrb[0].mxu0 %v827
    %v1336 = vpop.f32.mrb[0].mxu0
    %v1337 = vadd.f32 0.0, %v1336
    %v1338 = vpop.f32.mrb[0].mxu0
    %v1339 = vpop.f32.mrb[0].mxu0
    %v1340 = vadd.f32 0.0, %v1339
    %v1341 = vpop.f32.mrb[0].mxu0
    %1342 = vmatprep.mubr.bf16.mxu0 0
    %1343 = vmatmul.mubr.bf16.gmra.mrb[0].mxu0 %v830
    %v1344 = vpop.f32.mrb[0].mxu0
    %v1345 = vadd.f32 0.0, %v1344
    %v1346 = vpop.f32.mrb[0].mxu0
    %v1347 = vpop.f32.mrb[0].mxu0
    %v1348 = vadd.f32 0.0, %v1347
    %v1349 = vpop.f32.mrb[0].mxu0
    %1350 = vmatprep.mubr.bf16.mxu0 0
    %1351 = vmatmul.mubr.bf16.gmra.mrb[0].mxu0 %v833
    %v1352 = vpop.f32.mrb[0].mxu0
    %v1353 = vadd.f32 0.0, %v1352
    %v1354 = vpop.f32.mrb[0].mxu0
    %v1355 = vpop.f32.mrb[0].mxu0
    %v1356 = vadd.f32 0.0, %v1355
    %v1357 = vpop.f32.mrb[0].mxu0
    %1358 = vmatprep.mubr.bf16.mxu0 0
    %1359 = vmatmul.mubr.bf16.gmra.mrb[0].mxu0 %v836
    %v1360 = vpop.f32.mrb[0].mxu0
    %v1361 = vadd.f32 0.0, %v1360
    %v1362 = vpop.f32.mrb[0].mxu0
    %v1363 = vpop.f32.mrb[0].mxu0
    %v1364 = vadd.f32 0.0, %v1363
    %v1365 = vpop.f32.mrb[0].mxu0
    %1366 = vmatprep.mubr.bf16.mxu0 0
    %1367 = vmatmul.mubr.bf16.gmra.mrb[0].mxu0 %v839
    %v1368 = vpop.f32.mrb[0].mxu0
    %v1369 = vadd.f32 0.0, %v1368
    %v1370 = vpop.f32.mrb[0].mxu0
    %v1371 = vpop.f32.mrb[0].mxu0
    %v1372 = vadd.f32 0.0, %v1371
    %v1373 = vpop.f32.mrb[0].mxu0
    %1374 = vmatprep.mubr.bf16.mxu0 0
    %1375 = vmatmul.mubr.bf16.gmra.mrb[0].mxu0 %v842
    %v1376 = vpop.f32.mrb[0].mxu0
    %v1377 = vadd.f32 0.0, %v1376
    %v1378 = vpop.f32.mrb[0].mxu0
    %v1379 = vpop.f32.mrb[0].mxu0
    %v1380 = vadd.f32 0.0, %v1379
    %v1381 = vpop.f32.mrb[0].mxu0
    %1382 = vmatprep.mubr.bf16.mxu0 0
    %1383 = vmatmul.mubr.bf16.gmra.mrb[0].mxu0 %v845
    %v1384 = vpop.f32.mrb[0].mxu0
    %v1385 = vadd.f32 0.0, %v1384
    %v1386 = vpop.f32.mrb[0].mxu0
    %v1387 = vpop.f32.mrb[0].mxu0
    %v1388 = vadd.f32 0.0, %v1387
    %v1389 = vpop.f32.mrb[0].mxu0
    %1390 = vmatprep.mubr.bf16.mxu0 0
    %1391 = vmatmul.mubr.bf16.gmra.mrb[0].mxu0 %v848
    %v1392 = vpop.f32.mrb[0].mxu0
    %v1393 = vadd.f32 0.0, %v1392
    %v1394 = vpop.f32.mrb[0].mxu0
    %v1395 = vpop.f32.mrb[0].mxu0
    %v1396 = vadd.f32 0.0, %v1395
    %v1397 = vpop.f32.mrb[0].mxu0
    %1398 = vmatprep.mubr.bf16.mxu0 0
    %1399 = vmatmul.mubr.bf16.gmra.mrb[0].mxu0 %v851
    %v1400 = vpop.f32.mrb[0].mxu0
    %v1401 = vadd.f32 0.0, %v1400
    %v1402 = vpop.f32.mrb[0].mxu0
    %v1403 = vpop.f32.mrb[0].mxu0
    %v1404 = vadd.f32 0.0, %v1403
    %v1405 = vpop.f32.mrb[0].mxu0
    %1406 = vmatprep.mubr.bf16.mxu0 0
    %1407 = vmatmul.mubr.bf16.gmra.mrb[0].mxu0 %v854
    %v1408 = vpop.f32.mrb[0].mxu0
    %v1409 = vadd.f32 0.0, %v1408
    %v1410 = vpop.f32.mrb[0].mxu0
    %v1411 = vpop.f32.mrb[0].mxu0
    %v1412 = vadd.f32 0.0, %v1411
    %v1413 = vpop.f32.mrb[0].mxu0
    %1414 = vmatprep.mubr.bf16.mxu0 0
    %1415 = vmatmul.mubr.bf16.gmra.mrb[0].mxu0 %v857
    %v1416 = vpop.f32.mrb[0].mxu0
    %v1417 = vadd.f32 0.0, %v1416
    %v1418 = vpop.f32.mrb[0].mxu0
    %v1419 = vpop.f32.mrb[0].mxu0
    %v1420 = vadd.f32 0.0, %v1419
    %v1421 = vpop.f32.mrb[0].mxu0
    %1422 = vmatprep.mubr.bf16.mxu0 0
    %1423 = vmatmul.mubr.bf16.gmra.mrb[0].mxu0 %v860
    %v1424 = vpop.f32.mrb[0].mxu0
    %v1425 = vadd.f32 0.0, %v1424
    %v1426 = vpop.f32.mrb[0].mxu0
    %v1427 = vpop.f32.mrb[0].mxu0
    %v1428 = vadd.f32 0.0, %v1427
    %v1429 = vpop.f32.mrb[0].mxu0
    %1430 = vmatprep.mubr.bf16.mxu0 0
    %1431 = vmatmul.mubr.bf16.gmra.mrb[0].mxu0 %v863
    %v1432 = vpop.f32.mrb[0].mxu0
    %v1433 = vadd.f32 0.0, %v1432
    %v1434 = vpop.f32.mrb[0].mxu0
    %v1435 = vpop.f32.mrb[0].mxu0
    %v1436 = vadd.f32 0.0, %v1435
    %v1437 = vpop.f32.mrb[0].mxu0
    %1438 = vmatprep.mubr.bf16.mxu0 0
    %1439 = vmatmul.mubr.bf16.gmra.mrb[0].mxu0 %v866
    %v1440 = vpop.f32.mrb[0].mxu0
    %v1441 = vadd.f32 0.0, %v1440
    %v1442 = vpop.f32.mrb[0].mxu0
    %v1443 = vpop.f32.mrb[0].mxu0
    %v1444 = vadd.f32 0.0, %v1443
    %v1445 = vpop.f32.mrb[0].mxu0
    %1446 = vmatprep.mubr.bf16.mxu0 0
    %1447 = vmatmul.mubr.bf16.gmra.mrb[0].mxu0 %v869
    %v1448 = vpop.f32.mrb[0].mxu0
    %v1449 = vadd.f32 0.0, %v1448
    %v1450 = vpop.f32.mrb[0].mxu0
    %v1451 = vpop.f32.mrb[0].mxu0
    %v1452 = vadd.f32 0.0, %v1451
    %v1453 = vpop.f32.mrb[0].mxu0
    %1454 = vmatprep.mubr.bf16.mxu0 0
    %1455 = vmatmul.mubr.bf16.gmra.mrb[0].mxu0 %v872
    %v1456 = vpop.f32.mrb[0].mxu0
    %v1457 = vadd.f32 0.0, %v1456
    %v1458 = vpop.f32.mrb[0].mxu0
    %v1459 = vpop.f32.mrb[0].mxu0
    %v1460 = vadd.f32 0.0, %v1459
    %v1461 = vpop.f32.mrb[0].mxu0
    %1462 = vmatprep.mubr.bf16.mxu0 0
    %1463 = vmatmul.mubr.bf16.gmra.mrb[0].mxu0 %v875
    %v1464 = vpop.f32.mrb[0].mxu0
    %v1465 = vadd.f32 0.0, %v1464
    %v1466 = vpop.f32.mrb[0].mxu0
    %v1467 = vpop.f32.mrb[0].mxu0
    %v1468 = vadd.f32 0.0, %v1467
    %v1469 = vpop.f32.mrb[0].mxu0
    %1470 = vmatprep.mubr.bf16.mxu0 0
    %1471 = vmatmul.mubr.bf16.gmra.mrb[0].mxu0 %v878
    %v1472 = vpop.f32.mrb[0].mxu0
    %v1473 = vadd.f32 0.0, %v1472
    %v1474 = vpop.f32.mrb[0].mxu0
    %v1475 = vpop.f32.mrb[0].mxu0
    %v1476 = vadd.f32 0.0, %v1475
    %v1477 = vpop.f32.mrb[0].mxu0
    %1478 = vmatprep.mubr.bf16.mxu0 0
    %1479 = vmatmul.mubr.bf16.gmra.mrb[0].mxu0 %v881
    %v1480 = vpop.f32.mrb[0].mxu0
    %v1481 = vadd.f32 0.0, %v1480
    %v1482 = vpop.f32.mrb[0].mxu0
    %v1483 = vpop.f32.mrb[0].mxu0
    %v1484 = vadd.f32 0.0, %v1483
    %v1485 = vpop.f32.mrb[0].mxu0
    %1486 = vmatprep.mubr.bf16.mxu0 0
    %1487 = vmatmul.mubr.bf16.gmra.mrb[0].mxu0 %v884
    %v1488 = vpop.f32.mrb[0].mxu0
    %v1489 = vadd.f32 0.0, %v1488
    %v1490 = vpop.f32.mrb[0].mxu0
    %v1491 = vpop.f32.mrb[0].mxu0
    %v1492 = vadd.f32 0.0, %v1491
    %v1493 = vpop.f32.mrb[0].mxu0
    %1494 = vmatprep.mubr.bf16.mxu0 0
    %1495 = vmatmul.mubr.bf16.gmra.mrb[0].mxu0 %v887
    %v1496 = vpop.f32.mrb[0].mxu0
    %v1497 = vadd.f32 0.0, %v1496
    %v1498 = vpop.f32.mrb[0].mxu0
    %v1499 = vpop.f32.mrb[0].mxu0
    %v1500 = vadd.f32 0.0, %v1499
    %v1501 = vpop.f32.mrb[0].mxu0
    %1502 = vmatprep.mubr.bf16.mxu0 0
    %1503 = vmatmul.mubr.bf16.gmra.mrb[0].mxu0 %v890
    %v1504 = vpop.f32.mrb[0].mxu0
    %v1505 = vadd.f32 0.0, %v1504
    %v1506 = vpop.f32.mrb[0].mxu0
    %v1507 = vpop.f32.mrb[0].mxu0
    %v1508 = vadd.f32 0.0, %v1507
    %v1509 = vpop.f32.mrb[0].mxu0
    %1510 = vmatprep.mubr.bf16.mxu0 0
    %1511 = vmatmul.mubr.bf16.gmra.mrb[0].mxu0 %v893
    %v1512 = vpop.f32.mrb[0].mxu0
    %v1513 = vadd.f32 0.0, %v1512
    %v1514 = vpop.f32.mrb[0].mxu0
    %v1515 = vpop.f32.mrb[0].mxu0
    %v1516 = vadd.f32 0.0, %v1515
    %v1517 = vpop.f32.mrb[0].mxu0
    %1518 = vmatprep.mubr.bf16.mxu0 0
    %1519 = vmatmul.mubr.bf16.gmra.mrb[0].mxu0 %v896
    %v1520 = vpop.f32.mrb[0].mxu0
    %v1521 = vadd.f32 0.0, %v1520
    %v1522 = vpop.f32.mrb[0].mxu0
    %v1523 = vpop.f32.mrb[0].mxu0
    %v1524 = vadd.f32 0.0, %v1523
    %v1525 = vpop.f32.mrb[0].mxu0
    %1526 = vmatprep.mubr.bf16.mxu0 0
    %1527 = vmatmul.mubr.bf16.gmra.mrb[0].mxu0 %v899
    %v1528 = vpop.f32.mrb[0].mxu0
    %v1529 = vadd.f32 0.0, %v1528
    %v1530 = vpop.f32.mrb[0].mxu0
    %v1531 = vpop.f32.mrb[0].mxu0
    %v1532 = vadd.f32 0.0, %v1531
    %v1533 = vpop.f32.mrb[0].mxu0
    %1534 = vmatprep.mubr.bf16.mxu0 0
    %1535 = vmatmul.mubr.bf16.gmra.mrb[0].mxu0 %v902
    %v1536 = vpop.f32.mrb[0].mxu0
    %v1537 = vadd.f32 0.0, %v1536
    %v1538 = vpop.f32.mrb[0].mxu0
    %v1539 = vpop.f32.mrb[0].mxu0
    %v1540 = vadd.f32 0.0, %v1539
    %v1541 = vpop.f32.mrb[0].mxu0
    %1542 = vmatprep.mubr.bf16.mxu0 0
    %1543 = vmatmul.mubr.bf16.gmra.mrb[0].mxu0 %v905
    %v1544 = vpop.f32.mrb[0].mxu0
    %v1545 = vadd.f32 0.0, %v1544
    %v1546 = vpop.f32.mrb[0].mxu0
    %v1547 = vpop.f32.mrb[0].mxu0
    %v1548 = vadd.f32 0.0, %v1547
    %v1549 = vpop.f32.mrb[0].mxu0
    %1550 = vmatprep.mubr.bf16.mxu0 0
    %1551 = vmatmul.mubr.bf16.gmra.mrb[0].mxu0 %v908
    %v1552 = vpop.f32.mrb[0].mxu0
    %v1553 = vadd.f32 0.0, %v1552
    %v1554 = vpop.f32.mrb[0].mxu0
    %v1555 = vpop.f32.mrb[0].mxu0
    %v1556 = vadd.f32 0.0, %v1555
    %v1557 = vpop.f32.mrb[0].mxu0
    %1558 = vmatprep.mubr.bf16.mxu0 0
    %1559 = vmatmul.mubr.bf16.gmra.mrb[0].mxu0 %v911
    %v1560 = vpop.f32.mrb[0].mxu0
    %v1561 = vadd.f32 0.0, %v1560
    %v1562 = vpop.f32.mrb[0].mxu0
    %v1563 = vpop.f32.mrb[0].mxu0
    %v1564 = vadd.f32 0.0, %v1563
    %v1565 = vpop.f32.mrb[0].mxu0
    %1566 = vmatprep.mubr.bf16.mxu0 0
    %1567 = vmatmul.mubr.bf16.gmra.mrb[0].mxu0 %v914
    %v1568 = vpop.f32.mrb[0].mxu0
    %v1569 = vadd.f32 0.0, %v1568
    %v1570 = vpop.f32.mrb[0].mxu0
    %v1571 = vpop.f32.mrb[0].mxu0
    %v1572 = vadd.f32 0.0, %v1571
    %v1573 = vpop.f32.mrb[0].mxu0
    %1574 = vmatprep.mubr.bf16.mxu0 0
    %1575 = vmatmul.mubr.bf16.gmra.mrb[0].mxu0 %v917
    %v1576 = vpop.f32.mrb[0].mxu0
    %v1577 = vadd.f32 0.0, %v1576
    %v1578 = vpop.f32.mrb[0].mxu0
    %v1579 = vpop.f32.mrb[0].mxu0
    %v1580 = vadd.f32 0.0, %v1579
    %v1581 = vpop.f32.mrb[0].mxu0
    %1582 = vmatprep.mubr.bf16.mxu0 0
    %1583 = vmatmul.mubr.bf16.gmra.mrb[0].mxu0 %v920
    %v1584 = vpop.f32.mrb[0].mxu0
    %v1585 = vadd.f32 0.0, %v1584
    %v1586 = vpop.f32.mrb[0].mxu0
    %v1587 = vpop.f32.mrb[0].mxu0
    %v1588 = vadd.f32 0.0, %v1587
    %v1589 = vpop.f32.mrb[0].mxu0
    %1590 = vmatprep.mubr.bf16.mxu0 0
    %1591 = vmatmul.mubr.bf16.gmra.mrb[0].mxu0 %v923
    %v1592 = vpop.f32.mrb[0].mxu0
    %v1593 = vadd.f32 0.0, %v1592
    %v1594 = vpop.f32.mrb[0].mxu0
    %v1595 = vpop.f32.mrb[0].mxu0
    %v1596 = vadd.f32 0.0, %v1595
    %v1597 = vpop.f32.mrb[0].mxu0
    %1598 = vmatprep.mubr.bf16.mxu0 0
    %1599 = vmatmul.mubr.bf16.gmra.mrb[0].mxu0 %v926
    %v1600 = vpop.f32.mrb[0].mxu0
    %v1601 = vadd.f32 0.0, %v1600
    %v1602 = vpop.f32.mrb[0].mxu0
    %v1603 = vpop.f32.mrb[0].mxu0
    %v1604 = vadd.f32 0.0, %v1603
    %v1605 = vpop.f32.mrb[0].mxu0
    %1606 = vmatprep.mubr.bf16.mxu0 0
    %1607 = vmatmul.mubr.bf16.gmra.mrb[0].mxu0 %v929
    %v1608 = vpop.f32.mrb[0].mxu0
    %v1609 = vadd.f32 0.0, %v1608
    %v1610 = vpop.f32.mrb[0].mxu0
    %v1611 = vpop.f32.mrb[0].mxu0
    %v1612 = vadd.f32 0.0, %v1611
    %v1613 = vpop.f32.mrb[0].mxu0
    %1614 = vmatprep.mubr.bf16.mxu0 0
    %1615 = vmatmul.mubr.bf16.gmra.mrb[0].mxu0 %v932
    %v1616 = vpop.f32.mrb[0].mxu0
    %v1617 = vadd.f32 0.0, %v1616
    %v1618 = vpop.f32.mrb[0].mxu0
    %v1619 = vpop.f32.mrb[0].mxu0
    %v1620 = vadd.f32 0.0, %v1619
    %v1621 = vpop.f32.mrb[0].mxu0
    %1622 = vmatprep.mubr.bf16.mxu0 0
    %1623 = vmatmul.mubr.bf16.gmra.mrb[0].mxu0 %v935
    %v1624 = vpop.f32.mrb[0].mxu0
    %v1625 = vadd.f32 0.0, %v1624
    %v1626 = vpop.f32.mrb[0].mxu0
    %v1627 = vpop.f32.mrb[0].mxu0
    %v1628 = vadd.f32 0.0, %v1627
    %v1629 = vpop.f32.mrb[0].mxu0
    %1630 = vmatprep.mubr.bf16.mxu0 0
    %1631 = vmatmul.mubr.bf16.gmra.mrb[0].mxu0 %v938
    %v1632 = vpop.f32.mrb[0].mxu0
    %v1633 = vadd.f32 0.0, %v1632
    %v1634 = vpop.f32.mrb[0].mxu0
    %v1635 = vpop.f32.mrb[0].mxu0
    %v1636 = vadd.f32 0.0, %v1635
    %v1637 = vpop.f32.mrb[0].mxu0
    %1638 = vmatprep.mubr.bf16.mxu0 0
    %1639 = vmatmul.mubr.bf16.gmra.mrb[0].mxu0 %v941
    %v1640 = vpop.f32.mrb[0].mxu0
    %v1641 = vadd.f32 0.0, %v1640
    %v1642 = vpop.f32.mrb[0].mxu0
    %v1643 = vpop.f32.mrb[0].mxu0
    %v1644 = vadd.f32 0.0, %v1643
    %v1645 = vpop.f32.mrb[0].mxu0
    %1646 = vmatprep.mubr.bf16.mxu0 0
    %1647 = vmatmul.mubr.bf16.gmra.mrb[0].mxu0 %v944
    %v1648 = vpop.f32.mrb[0].mxu0
    %v1649 = vadd.f32 0.0, %v1648
    %v1650 = vpop.f32.mrb[0].mxu0
    %v1651 = vpop.f32.mrb[0].mxu0
    %v1652 = vadd.f32 0.0, %v1651
    %v1653 = vpop.f32.mrb[0].mxu0
    %1654 = vmatprep.mubr.bf16.mxu0 0
    %1655 = vmatmul.mubr.bf16.gmra.mrb[0].mxu0 %v947
    %v1656 = vpop.f32.mrb[0].mxu0
    %v1657 = vadd.f32 0.0, %v1656
    %v1658 = vpop.f32.mrb[0].mxu0
    %v1659 = vpop.f32.mrb[0].mxu0
    %v1660 = vadd.f32 0.0, %v1659
    %v1661 = vpop.f32.mrb[0].mxu0
    %1662 = vmatprep.mubr.bf16.mxu0 0
    %1663 = vmatmul.mubr.bf16.gmra.mrb[0].mxu0 %v950
    %v1664 = vpop.f32.mrb[0].mxu0
    %v1665 = vadd.f32 0.0, %v1664
    %v1666 = vpop.f32.mrb[0].mxu0
    %v1667 = vpop.f32.mrb[0].mxu0
    %v1668 = vadd.f32 0.0, %v1667
    %v1669 = vpop.f32.mrb[0].mxu0
    %1670 = vmatprep.mubr.bf16.mxu0 0
    %1671 = vmatmul.mubr.bf16.gmra.mrb[0].mxu0 %v953
    %v1672 = vpop.f32.mrb[0].mxu0
    %v1673 = vadd.f32 0.0, %v1672
    %v1674 = vpop.f32.mrb[0].mxu0
    %v1675 = vpop.f32.mrb[0].mxu0
    %v1676 = vadd.f32 0.0, %v1675
    %v1677 = vpop.f32.mrb[0].mxu0
    %1678 = vmatprep.mubr.bf16.mxu0 0
    %1679 = vmatmul.mubr.bf16.gmra.mrb[0].mxu0 %v956
    %v1680 = vpop.f32.mrb[0].mxu0
    %v1681 = vadd.f32 0.0, %v1680
    %v1682 = vpop.f32.mrb[0].mxu0
    %v1683 = vpop.f32.mrb[0].mxu0
    %v1684 = vadd.f32 0.0, %v1683
    %v1685 = vpop.f32.mrb[0].mxu0
    %1686 = vmatprep.mubr.bf16.mxu0 0
    %1687 = vmatmul.mubr.bf16.gmra.mrb[0].mxu0 %v959
    %v1688 = vpop.f32.mrb[0].mxu0
    %v1689 = vadd.f32 0.0, %v1688
    %v1690 = vpop.f32.mrb[0].mxu0
    %v1691 = vpop.f32.mrb[0].mxu0
    %v1692 = vadd.f32 0.0, %v1691
    %v1693 = vpop.f32.mrb[0].mxu0
    %1694 = vmatprep.mubr.bf16.mxu0 0
    %1695 = vmatmul.mubr.bf16.gmra.mrb[0].mxu0 %v962
    %v1696 = vpop.f32.mrb[0].mxu0
    %v1697 = vadd.f32 0.0, %v1696
    %v1698 = vpop.f32.mrb[0].mxu0
    %v1699 = vpop.f32.mrb[0].mxu0
    %v1700 = vadd.f32 0.0, %v1699
    %v1701 = vpop.f32.mrb[0].mxu0
    %1702 = vmatprep.mubr.bf16.mxu0 0
    %1703 = vmatmul.mubr.bf16.gmra.mrb[0].mxu0 %v965
    %v1704 = vpop.f32.mrb[0].mxu0
    %v1705 = vadd.f32 0.0, %v1704
    %v1706 = vpop.f32.mrb[0].mxu0
    %v1707 = vpop.f32.mrb[0].mxu0
    %v1708 = vadd.f32 0.0, %v1707
    %v1709 = vpop.f32.mrb[0].mxu0
    %1710 = vmatprep.mubr.bf16.mxu0 0
    %1711 = vmatmul.mubr.bf16.gmra.mrb[0].mxu0 %v968
    %v1712 = vpop.f32.mrb[0].mxu0
    %v1713 = vadd.f32 0.0, %v1712
    %v1714 = vpop.f32.mrb[0].mxu0
    %v1715 = vpop.f32.mrb[0].mxu0
    %v1716 = vadd.f32 0.0, %v1715
    %v1717 = vpop.f32.mrb[0].mxu0
    %1718 = vmatprep.mubr.bf16.mxu0 0
    %1719 = vmatmul.mubr.bf16.gmra.mrb[0].mxu0 %v971
    %v1720 = vpop.f32.mrb[0].mxu0
    %v1721 = vadd.f32 0.0, %v1720
    %v1722 = vpop.f32.mrb[0].mxu0
    %v1723 = vpop.f32.mrb[0].mxu0
    %v1724 = vadd.f32 0.0, %v1723
    %v1725 = vpop.f32.mrb[0].mxu0
    %1726 = vmatprep.mubr.bf16.mxu0 0
    %1727 = vmatmul.mubr.bf16.gmra.mrb[0].mxu0 %v974
    %v1728 = vpop.f32.mrb[0].mxu0
    %v1729 = vadd.f32 0.0, %v1728
    %v1730 = vpop.f32.mrb[0].mxu0
    %v1731 = vpop.f32.mrb[0].mxu0
    %v1732 = vadd.f32 0.0, %v1731
    %v1733 = vpop.f32.mrb[0].mxu0
    %1734 = vmatprep.mubr.bf16.mxu0 0
    %1735 = vmatmul.mubr.bf16.gmra.mrb[0].mxu0 %v977
    %v1736 = vpop.f32.mrb[0].mxu0
    %v1737 = vadd.f32 0.0, %v1736
    %v1738 = vpop.f32.mrb[0].mxu0
    %v1739 = vpop.f32.mrb[0].mxu0
    %v1740 = vadd.f32 0.0, %v1739
    %v1741 = vpop.f32.mrb[0].mxu0
    %1742 = vmatprep.mubr.bf16.mxu0 0
    %1743 = vmatmul.mubr.bf16.gmra.mrb[0].mxu0 %v980
    %v1744 = vpop.f32.mrb[0].mxu0
    %v1745 = vadd.f32 0.0, %v1744
    %v1746 = vpop.f32.mrb[0].mxu0
    %v1747 = vpop.f32.mrb[0].mxu0
    %v1748 = vadd.f32 0.0, %v1747
    %v1749 = vpop.f32.mrb[0].mxu0
    %1750 = vmatprep.mubr.bf16.mxu0 0
    %1751 = vmatmul.mubr.bf16.gmra.mrb[0].mxu0 %v983
    %v1752 = vpop.f32.mrb[0].mxu0
    %v1753 = vadd.f32 0.0, %v1752
    %v1754 = vpop.f32.mrb[0].mxu0
    %v1755 = vpop.f32.mrb[0].mxu0
    %v1756 = vadd.f32 0.0, %v1755
    %v1757 = vpop.f32.mrb[0].mxu0
    %1758 = vmatprep.mubr.bf16.mxu0 0
    %1759 = vmatmul.mubr.bf16.gmra.mrb[0].mxu0 %v986
    %v1760 = vpop.f32.mrb[0].mxu0
    %v1761 = vadd.f32 0.0, %v1760
    %v1762 = vpop.f32.mrb[0].mxu0
    %v1763 = vpop.f32.mrb[0].mxu0
    %v1764 = vadd.f32 0.0, %v1763
    %v1765 = vpop.f32.mrb[0].mxu0
    %1766 = vmatprep.mubr.bf16.mxu0 0
    %1767 = vmatmul.mubr.bf16.gmra.mrb[0].mxu0 %v989
    %v1768 = vpop.f32.mrb[0].mxu0
    %v1769 = vadd.f32 0.0, %v1768
    %v1770 = vpop.f32.mrb[0].mxu0
    %v1771 = vpop.f32.mrb[0].mxu0
    %v1772 = vadd.f32 0.0, %v1771
    %v1773 = vpop.f32.mrb[0].mxu0
    %1774 = vmatprep.mubr.bf16.mxu0 0
    %1775 = vmatmul.mubr.bf16.gmra.mrb[0].mxu0 %v992
    %v1776 = vpop.f32.mrb[0].mxu0
    %v1777 = vadd.f32 0.0, %v1776
    %v1778 = vpop.f32.mrb[0].mxu0
    %v1779 = vpop.f32.mrb[0].mxu0
    %v1780 = vadd.f32 0.0, %v1779
    %v1781 = vpop.f32.mrb[0].mxu0
    %1782 = vmatprep.mubr.bf16.mxu0 0
    %1783 = vmatmul.mubr.bf16.gmra.mrb[0].mxu0 %v995
    %v1784 = vpop.f32.mrb[0].mxu0
    %v1785 = vadd.f32 0.0, %v1784
    %v1786 = vpop.f32.mrb[0].mxu0
    %v1787 = vpop.f32.mrb[0].mxu0
    %v1788 = vadd.f32 0.0, %v1787
    %v1789 = vpop.f32.mrb[0].mxu0
    %1790 = vmatprep.mubr.bf16.mxu0 0
    %1791 = vmatmul.mubr.bf16.gmra.mrb[0].mxu0 %v998
    %v1792 = vpop.f32.mrb[0].mxu0
    %v1793 = vadd.f32 0.0, %v1792
    %v1794 = vpop.f32.mrb[0].mxu0
    %v1795 = vpop.f32.mrb[0].mxu0
    %v1796 = vadd.f32 0.0, %v1795
    %v1797 = vpop.f32.mrb[0].mxu0
    %1798 = vmatprep.mubr.bf16.mxu0 0
    %1799 = vmatmul.mubr.bf16.gmra.mrb[0].mxu0 %v1001
    %v1800 = vpop.f32.mrb[0].mxu0
    %v1801 = vadd.f32 0.0, %v1800
    %v1802 = vpop.f32.mrb[0].mxu0
    %v1803 = vpop.f32.mrb[0].mxu0
    %v1804 = vadd.f32 0.0, %v1803
    %v1805 = vpop.f32.mrb[0].mxu0
    %1806 = vmatprep.mubr.bf16.mxu0 0
    %1807 = vmatmul.mubr.bf16.gmra.mrb[0].mxu0 %v1004
    %v1808 = vpop.f32.mrb[0].mxu0
    %v1809 = vadd.f32 0.0, %v1808
    %v1810 = vpop.f32.mrb[0].mxu0
    %v1811 = vpop.f32.mrb[0].mxu0
    %v1812 = vadd.f32 0.0, %v1811
    %v1813 = vpop.f32.mrb[0].mxu0
    %1814 = vmatprep.mubr.bf16.mxu0 0
    %1815 = vmatmul.mubr.bf16.gmra.mrb[0].mxu0 %v1007
    %v1816 = vpop.f32.mrb[0].mxu0
    %v1817 = vadd.f32 0.0, %v1816
    %v1818 = vpop.f32.mrb[0].mxu0
    %v1819 = vpop.f32.mrb[0].mxu0
    %v1820 = vadd.f32 0.0, %v1819
    %v1821 = vpop.f32.mrb[0].mxu0
    %1822 = vmatprep.mubr.bf16.mxu0 0
    %1823 = vmatmul.mubr.bf16.gmra.mrb[0].mxu0 %v1010
    %v1824 = vpop.f32.mrb[0].mxu0
    %v1825 = vadd.f32 0.0, %v1824
    %v1826 = vpop.f32.mrb[0].mxu0
    %v1827 = vpop.f32.mrb[0].mxu0
    %v1828 = vadd.f32 0.0, %v1827
    %v1829 = vpop.f32.mrb[0].mxu0
    %1830 = vmatprep.mubr.bf16.mxu0 0
    %1831 = vmatmul.mubr.bf16.gmra.mrb[0].mxu0 %v1013
    %v1832 = vpop.f32.mrb[0].mxu0
    %v1833 = vadd.f32 0.0, %v1832
    %v1834 = vpop.f32.mrb[0].mxu0
    %v1835 = vpop.f32.mrb[0].mxu0
    %v1836 = vadd.f32 0.0, %v1835
    %v1837 = vpop.f32.mrb[0].mxu0
    %1838 = vdwg.mxu0
    %v1839 = vld [vmem:[%s2] sm:$0x1]
    %v1841 = vlaneseq
    %v1842 = vshrl.u32 %v1841, 7
    %v1843 = vsub.s32 0, %v1842
    %v1844 = vrot.slane %v1839, %v1843
    %v1846 = vmul.f32 %v1057, %v1844
    %v1847 = vmul.f32 %v1060, %v1844
    %v1848 = vmul.f32 %v1065, %v1844
    %v1849 = vmul.f32 %v1068, %v1844
    %v1850 = vmul.f32 %v1073, %v1844
    %v1851 = vmul.f32 %v1076, %v1844
    %v1852 = vmul.f32 %v1081, %v1844
    %v1853 = vmul.f32 %v1084, %v1844
    %v1854 = vmul.f32 %v1089, %v1844
    %v1855 = vmul.f32 %v1092, %v1844
    %v1856 = vmul.f32 %v1097, %v1844
    %v1857 = vmul.f32 %v1100, %v1844
    %v1858 = vmul.f32 %v1105, %v1844
    %v1859 = vmul.f32 %v1108, %v1844
    %v1860 = vmul.f32 %v1113, %v1844
    %v1861 = vmul.f32 %v1116, %v1844
    %v1862 = vmul.f32 %v1121, %v1844
    %v1863 = vmul.f32 %v1124, %v1844
    %v1864 = vmul.f32 %v1129, %v1844
    %v1865 = vmul.f32 %v1132, %v1844
    %v1866 = vmul.f32 %v1137, %v1844
    %v1867 = vmul.f32 %v1140, %v1844
    %v1868 = vmul.f32 %v1145, %v1844
    %v1869 = vmul.f32 %v1148, %v1844
    %v1870 = vmul.f32 %v1153, %v1844
    %v1871 = vmul.f32 %v1156, %v1844
    %v1872 = vmul.f32 %v1161, %v1844
    %v1873 = vmul.f32 %v1164, %v1844
    %v1874 = vmul.f32 %v1169, %v1844
    %v1875 = vmul.f32 %v1172, %v1844
    %v1876 = vmul.f32 %v1177, %v1844
    %v1877 = vmul.f32 %v1180, %v1844
    %v1878 = vmul.f32 %v1185, %v1844
    %v1879 = vmul.f32 %v1188, %v1844
    %v1880 = vmul.f32 %v1193, %v1844
    %v1881 = vmul.f32 %v1196, %v1844
    %v1882 = vmul.f32 %v1201, %v1844
    %v1883 = vmul.f32 %v1204, %v1844
    %v1884 = vmul.f32 %v1209, %v1844
    %v1885 = vmul.f32 %v1212, %v1844
    %v1886 = vmul.f32 %v1217, %v1844
    %v1887 = vmul.f32 %v1220, %v1844
    %v1888 = vmul.f32 %v1225, %v1844
    %v1889 = vmul.f32 %v1228, %v1844
    %v1890 = vmul.f32 %v1233, %v1844
    %v1891 = vmul.f32 %v1236, %v1844
    %v1892 = vmul.f32 %v1241, %v1844
    %v1893 = vmul.f32 %v1244, %v1844
    %v1894 = vmul.f32 %v1249, %v1844
    %v1895 = vmul.f32 %v1252, %v1844
    %v1896 = vmul.f32 %v1257, %v1844
    %v1897 = vmul.f32 %v1260, %v1844
    %v1898 = vmul.f32 %v1265, %v1844
    %v1899 = vmul.f32 %v1268, %v1844
    %v1900 = vmul.f32 %v1273, %v1844
    %v1901 = vmul.f32 %v1276, %v1844
    %v1902 = vmul.f32 %v1281, %v1844
    %v1903 = vmul.f32 %v1284, %v1844
    %v1904 = vmul.f32 %v1289, %v1844
    %v1905 = vmul.f32 %v1292, %v1844
    %v1906 = vmul.f32 %v1297, %v1844
    %v1907 = vmul.f32 %v1300, %v1844
    %v1908 = vmul.f32 %v1305, %v1844
    %v1909 = vmul.f32 %v1308, %v1844
    %v1910 = vmul.f32 %v1313, %v1844
    %v1911 = vmul.f32 %v1316, %v1844
    %v1912 = vmul.f32 %v1321, %v1844
    %v1913 = vmul.f32 %v1324, %v1844
    %v1914 = vmul.f32 %v1329, %v1844
    %v1915 = vmul.f32 %v1332, %v1844
    %v1916 = vmul.f32 %v1337, %v1844
    %v1917 = vmul.f32 %v1340, %v1844
    %v1918 = vmul.f32 %v1345, %v1844
    %v1919 = vmul.f32 %v1348, %v1844
    %v1920 = vmul.f32 %v1353, %v1844
    %v1921 = vmul.f32 %v1356, %v1844
    %v1922 = vmul.f32 %v1361, %v1844
    %v1923 = vmul.f32 %v1364, %v1844
    %v1924 = vmul.f32 %v1369, %v1844
    %v1925 = vmul.f32 %v1372, %v1844
    %v1926 = vmul.f32 %v1377, %v1844
    %v1927 = vmul.f32 %v1380, %v1844
    %v1928 = vmul.f32 %v1385, %v1844
    %v1929 = vmul.f32 %v1388, %v1844
    %v1930 = vmul.f32 %v1393, %v1844
    %v1931 = vmul.f32 %v1396, %v1844
    %v1932 = vmul.f32 %v1401, %v1844
    %v1933 = vmul.f32 %v1404, %v1844
    %v1934 = vmul.f32 %v1409, %v1844
    %v1935 = vmul.f32 %v1412, %v1844
    %v1936 = vmul.f32 %v1417, %v1844
    %v1937 = vmul.f32 %v1420, %v1844
    %v1938 = vmul.f32 %v1425, %v1844
    %v1939 = vmul.f32 %v1428, %v1844
    %v1940 = vmul.f32 %v1433, %v1844
    %v1941 = vmul.f32 %v1436, %v1844
    %v1942 = vmul.f32 %v1441, %v1844
    %v1943 = vmul.f32 %v1444, %v1844
    %v1944 = vmul.f32 %v1449, %v1844
    %v1945 = vmul.f32 %v1452, %v1844
    %v1946 = vmul.f32 %v1457, %v1844
    %v1947 = vmul.f32 %v1460, %v1844
    %v1948 = vmul.f32 %v1465, %v1844
    %v1949 = vmul.f32 %v1468, %v1844
    %v1950 = vmul.f32 %v1473, %v1844
    %v1951 = vmul.f32 %v1476, %v1844
    %v1952 = vmul.f32 %v1481, %v1844
    %v1953 = vmul.f32 %v1484, %v1844
    %v1954 = vmul.f32 %v1489, %v1844
    %v1955 = vmul.f32 %v1492, %v1844
    %v1956 = vmul.f32 %v1497, %v1844
    %v1957 = vmul.f32 %v1500, %v1844
    %v1958 = vmul.f32 %v1505, %v1844
    %v1959 = vmul.f32 %v1508, %v1844
    %v1960 = vmul.f32 %v1513, %v1844
    %v1961 = vmul.f32 %v1516, %v1844
    %v1962 = vmul.f32 %v1521, %v1844
    %v1963 = vmul.f32 %v1524, %v1844
    %v1964 = vmul.f32 %v1529, %v1844
    %v1965 = vmul.f32 %v1532, %v1844
    %v1966 = vmul.f32 %v1537, %v1844
    %v1967 = vmul.f32 %v1540, %v1844
    %v1968 = vmul.f32 %v1545, %v1844
    %v1969 = vmul.f32 %v1548, %v1844
    %v1970 = vmul.f32 %v1553, %v1844
    %v1971 = vmul.f32 %v1556, %v1844
    %v1972 = vmul.f32 %v1561, %v1844
    %v1973 = vmul.f32 %v1564, %v1844
    %v1974 = vmul.f32 %v1569, %v1844
    %v1975 = vmul.f32 %v1572, %v1844
    %v1976 = vmul.f32 %v1577, %v1844
    %v1977 = vmul.f32 %v1580, %v1844
    %v1978 = vmul.f32 %v1585, %v1844
    %v1979 = vmul.f32 %v1588, %v1844
    %v1980 = vmul.f32 %v1593, %v1844
    %v1981 = vmul.f32 %v1596, %v1844
    %v1982 = vmul.f32 %v1601, %v1844
    %v1983 = vmul.f32 %v1604, %v1844
    %v1984 = vmul.f32 %v1609, %v1844
    %v1985 = vmul.f32 %v1612, %v1844
    %v1986 = vmul.f32 %v1617, %v1844
    %v1987 = vmul.f32 %v1620, %v1844
    %v1988 = vmul.f32 %v1625, %v1844
    %v1989 = vmul.f32 %v1628, %v1844
    %v1990 = vmul.f32 %v1633, %v1844
    %v1991 = vmul.f32 %v1636, %v1844
    %v1992 = vmul.f32 %v1641, %v1844
    %v1993 = vmul.f32 %v1644, %v1844
    %v1994 = vmul.f32 %v1649, %v1844
    %v1995 = vmul.f32 %v1652, %v1844
    %v1996 = vmul.f32 %v1657, %v1844
    %v1997 = vmul.f32 %v1660, %v1844
    %v1998 = vmul.f32 %v1665, %v1844
    %v1999 = vmul.f32 %v1668, %v1844
    %v2000 = vmul.f32 %v1673, %v1844
    %v2001 = vmul.f32 %v1676, %v1844
    %v2002 = vmul.f32 %v1681, %v1844
    %v2003 = vmul.f32 %v1684, %v1844
    %v2004 = vmul.f32 %v1689, %v1844
    %v2005 = vmul.f32 %v1692, %v1844
    %v2006 = vmul.f32 %v1697, %v1844
    %v2007 = vmul.f32 %v1700, %v1844
    %v2008 = vmul.f32 %v1705, %v1844
    %v2009 = vmul.f32 %v1708, %v1844
    %v2010 = vmul.f32 %v1713, %v1844
    %v2011 = vmul.f32 %v1716, %v1844
    %v2012 = vmul.f32 %v1721, %v1844
    %v2013 = vmul.f32 %v1724, %v1844
    %v2014 = vmul.f32 %v1729, %v1844
    %v2015 = vmul.f32 %v1732, %v1844
    %v2016 = vmul.f32 %v1737, %v1844
    %v2017 = vmul.f32 %v1740, %v1844
    %v2018 = vmul.f32 %v1745, %v1844
    %v2019 = vmul.f32 %v1748, %v1844
    %v2020 = vmul.f32 %v1753, %v1844
    %v2021 = vmul.f32 %v1756, %v1844
    %v2022 = vmul.f32 %v1761, %v1844
    %v2023 = vmul.f32 %v1764, %v1844
    %v2024 = vmul.f32 %v1769, %v1844
    %v2025 = vmul.f32 %v1772, %v1844
    %v2026 = vmul.f32 %v1777, %v1844
    %v2027 = vmul.f32 %v1780, %v1844
    %v2028 = vmul.f32 %v1785, %v1844
    %v2029 = vmul.f32 %v1788, %v1844
    %v2030 = vmul.f32 %v1793, %v1844
    %v2031 = vmul.f32 %v1796, %v1844
    %v2032 = vmul.f32 %v1801, %v1844
    %v2033 = vmul.f32 %v1804, %v1844
    %v2034 = vmul.f32 %v1809, %v1844
    %v2035 = vmul.f32 %v1812, %v1844
    %v2036 = vmul.f32 %v1817, %v1844
    %v2037 = vmul.f32 %v1820, %v1844
    %v2038 = vmul.f32 %v1825, %v1844
    %v2039 = vmul.f32 %v1828, %v1844
    %v2040 = vmul.f32 %v1833, %v1844
    %v2041 = vmul.f32 %v1836, %v1844
    %v2042 = vld [vmem:[%s3] sm:$0x1]
    %v2044 = vlaneseq
    %v2045 = vshrl.u32 %v2044, 7
    %v2046 = vsub.s32 0, %v2045
    %v2047 = vrot.slane %v2042, %v2046
    %v2049 = vadd.f32 %v1846, %v2047
    %v2050 = vadd.f32 %v1847, %v2047
    %v2051 = vadd.f32 %v1848, %v2047
    %v2052 = vadd.f32 %v1849, %v2047
    %v2053 = vadd.f32 %v1850, %v2047
    %v2054 = vadd.f32 %v1851, %v2047
    %v2055 = vadd.f32 %v1852, %v2047
    %v2056 = vadd.f32 %v1853, %v2047
    %v2057 = vadd.f32 %v1854, %v2047
    %v2058 = vadd.f32 %v1855, %v2047
    %v2059 = vadd.f32 %v1856, %v2047
    %v2060 = vadd.f32 %v1857, %v2047
    %v2061 = vadd.f32 %v1858, %v2047
    %v2062 = vadd.f32 %v1859, %v2047
    %v2063 = vadd.f32 %v1860, %v2047
    %v2064 = vadd.f32 %v1861, %v2047
    %v2065 = vadd.f32 %v1862, %v2047
    %v2066 = vadd.f32 %v1863, %v2047
    %v2067 = vadd.f32 %v1864, %v2047
    %v2068 = vadd.f32 %v1865, %v2047
    %v2069 = vadd.f32 %v1866, %v2047
    %v2070 = vadd.f32 %v1867, %v2047
    %v2071 = vadd.f32 %v1868, %v2047
    %v2072 = vadd.f32 %v1869, %v2047
    %v2073 = vadd.f32 %v1870, %v2047
    %v2074 = vadd.f32 %v1871, %v2047
    %v2075 = vadd.f32 %v1872, %v2047
    %v2076 = vadd.f32 %v1873, %v2047
    %v2077 = vadd.f32 %v1874, %v2047
    %v2078 = vadd.f32 %v1875, %v2047
    %v2079 = vadd.f32 %v1876, %v2047
    %v2080 = vadd.f32 %v1877, %v2047
    %v2081 = vadd.f32 %v1878, %v2047
    %v2082 = vadd.f32 %v1879, %v2047
    %v2083 = vadd.f32 %v1880, %v2047
    %v2084 = vadd.f32 %v1881, %v2047
    %v2085 = vadd.f32 %v1882, %v2047
    %v2086 = vadd.f32 %v1883, %v2047
    %v2087 = vadd.f32 %v1884, %v2047
    %v2088 = vadd.f32 %v1885, %v2047
    %v2089 = vadd.f32 %v1886, %v2047
    %v2090 = vadd.f32 %v1887, %v2047
    %v2091 = vadd.f32 %v1888, %v2047
    %v2092 = vadd.f32 %v1889, %v2047
    %v2093 = vadd.f32 %v1890, %v2047
    %v2094 = vadd.f32 %v1891, %v2047
    %v2095 = vadd.f32 %v1892, %v2047
    %v2096 = vadd.f32 %v1893, %v2047
    %v2097 = vadd.f32 %v1894, %v2047
    %v2098 = vadd.f32 %v1895, %v2047
    %v2099 = vadd.f32 %v1896, %v2047
    %v2100 = vadd.f32 %v1897, %v2047
    %v2101 = vadd.f32 %v1898, %v2047
    %v2102 = vadd.f32 %v1899, %v2047
    %v2103 = vadd.f32 %v1900, %v2047
    %v2104 = vadd.f32 %v1901, %v2047
    %v2105 = vadd.f32 %v1902, %v2047
    %v2106 = vadd.f32 %v1903, %v2047
    %v2107 = vadd.f32 %v1904, %v2047
    %v2108 = vadd.f32 %v1905, %v2047
    %v2109 = vadd.f32 %v1906, %v2047
    %v2110 = vadd.f32 %v1907, %v2047
    %v2111 = vadd.f32 %v1908, %v2047
    %v2112 = vadd.f32 %v1909, %v2047
    %v2113 = vadd.f32 %v1910, %v2047
    %v2114 = vadd.f32 %v1911, %v2047
    %v2115 = vadd.f32 %v1912, %v2047
    %v2116 = vadd.f32 %v1913, %v2047
    %v2117 = vadd.f32 %v1914, %v2047
    %v2118 = vadd.f32 %v1915, %v2047
    %v2119 = vadd.f32 %v1916, %v2047
    %v2120 = vadd.f32 %v1917, %v2047
    %v2121 = vadd.f32 %v1918, %v2047
    %v2122 = vadd.f32 %v1919, %v2047
    %v2123 = vadd.f32 %v1920, %v2047
    %v2124 = vadd.f32 %v1921, %v2047
    %v2125 = vadd.f32 %v1922, %v2047
    %v2126 = vadd.f32 %v1923, %v2047
    %v2127 = vadd.f32 %v1924, %v2047
    %v2128 = vadd.f32 %v1925, %v2047
    %v2129 = vadd.f32 %v1926, %v2047
    %v2130 = vadd.f32 %v1927, %v2047
    %v2131 = vadd.f32 %v1928, %v2047
    %v2132 = vadd.f32 %v1929, %v2047
    %v2133 = vadd.f32 %v1930, %v2047
    %v2134 = vadd.f32 %v1931, %v2047
    %v2135 = vadd.f32 %v1932, %v2047
    %v2136 = vadd.f32 %v1933, %v2047
    %v2137 = vadd.f32 %v1934, %v2047
    %v2138 = vadd.f32 %v1935, %v2047
    %v2139 = vadd.f32 %v1936, %v2047
    %v2140 = vadd.f32 %v1937, %v2047
    %v2141 = vadd.f32 %v1938, %v2047
    %v2142 = vadd.f32 %v1939, %v2047
    %v2143 = vadd.f32 %v1940, %v2047
    %v2144 = vadd.f32 %v1941, %v2047
    %v2145 = vadd.f32 %v1942, %v2047
    %v2146 = vadd.f32 %v1943, %v2047
    %v2147 = vadd.f32 %v1944, %v2047
    %v2148 = vadd.f32 %v1945, %v2047
    %v2149 = vadd.f32 %v1946, %v2047
    %v2150 = vadd.f32 %v1947, %v2047
    %v2151 = vadd.f32 %v1948, %v2047
    %v2152 = vadd.f32 %v1949, %v2047
    %v2153 = vadd.f32 %v1950, %v2047
    %v2154 = vadd.f32 %v1951, %v2047
    %v2155 = vadd.f32 %v1952, %v2047
    %v2156 = vadd.f32 %v1953, %v2047
    %v2157 = vadd.f32 %v1954, %v2047
    %v2158 = vadd.f32 %v1955, %v2047
    %v2159 = vadd.f32 %v1956, %v2047
    %v2160 = vadd.f32 %v1957, %v2047
    %v2161 = vadd.f32 %v1958, %v2047
    %v2162 = vadd.f32 %v1959, %v2047
    %v2163 = vadd.f32 %v1960, %v2047
    %v2164 = vadd.f32 %v1961, %v2047
    %v2165 = vadd.f32 %v1962, %v2047
    %v2166 = vadd.f32 %v1963, %v2047
    %v2167 = vadd.f32 %v1964, %v2047
    %v2168 = vadd.f32 %v1965, %v2047
    %v2169 = vadd.f32 %v1966, %v2047
    %v2170 = vadd.f32 %v1967, %v2047
    %v2171 = vadd.f32 %v1968, %v2047
    %v2172 = vadd.f32 %v1969, %v2047
    %v2173 = vadd.f32 %v1970, %v2047
    %v2174 = vadd.f32 %v1971, %v2047
    %v2175 = vadd.f32 %v1972, %v2047
    %v2176 = vadd.f32 %v1973, %v2047
    %v2177 = vadd.f32 %v1974, %v2047
    %v2178 = vadd.f32 %v1975, %v2047
    %v2179 = vadd.f32 %v1976, %v2047
    %v2180 = vadd.f32 %v1977, %v2047
    %v2181 = vadd.f32 %v1978, %v2047
    %v2182 = vadd.f32 %v1979, %v2047
    %v2183 = vadd.f32 %v1980, %v2047
    %v2184 = vadd.f32 %v1981, %v2047
    %v2185 = vadd.f32 %v1982, %v2047
    %v2186 = vadd.f32 %v1983, %v2047
    %v2187 = vadd.f32 %v1984, %v2047
    %v2188 = vadd.f32 %v1985, %v2047
    %v2189 = vadd.f32 %v1986, %v2047
    %v2190 = vadd.f32 %v1987, %v2047
    %v2191 = vadd.f32 %v1988, %v2047
    %v2192 = vadd.f32 %v1989, %v2047
    %v2193 = vadd.f32 %v1990, %v2047
    %v2194 = vadd.f32 %v1991, %v2047
    %v2195 = vadd.f32 %v1992, %v2047
    %v2196 = vadd.f32 %v1993, %v2047
    %v2197 = vadd.f32 %v1994, %v2047
    %v2198 = vadd.f32 %v1995, %v2047
    %v2199 = vadd.f32 %v1996, %v2047
    %v2200 = vadd.f32 %v1997, %v2047
    %v2201 = vadd.f32 %v1998, %v2047
    %v2202 = vadd.f32 %v1999, %v2047
    %v2203 = vadd.f32 %v2000, %v2047
    %v2204 = vadd.f32 %v2001, %v2047
    %v2205 = vadd.f32 %v2002, %v2047
    %v2206 = vadd.f32 %v2003, %v2047
    %v2207 = vadd.f32 %v2004, %v2047
    %v2208 = vadd.f32 %v2005, %v2047
    %v2209 = vadd.f32 %v2006, %v2047
    %v2210 = vadd.f32 %v2007, %v2047
    %v2211 = vadd.f32 %v2008, %v2047
    %v2212 = vadd.f32 %v2009, %v2047
    %v2213 = vadd.f32 %v2010, %v2047
    %v2214 = vadd.f32 %v2011, %v2047
    %v2215 = vadd.f32 %v2012, %v2047
    %v2216 = vadd.f32 %v2013, %v2047
    %v2217 = vadd.f32 %v2014, %v2047
    %v2218 = vadd.f32 %v2015, %v2047
    %v2219 = vadd.f32 %v2016, %v2047
    %v2220 = vadd.f32 %v2017, %v2047
    %v2221 = vadd.f32 %v2018, %v2047
    %v2222 = vadd.f32 %v2019, %v2047
    %v2223 = vadd.f32 %v2020, %v2047
    %v2224 = vadd.f32 %v2021, %v2047
    %v2225 = vadd.f32 %v2022, %v2047
    %v2226 = vadd.f32 %v2023, %v2047
    %v2227 = vadd.f32 %v2024, %v2047
    %v2228 = vadd.f32 %v2025, %v2047
    %v2229 = vadd.f32 %v2026, %v2047
    %v2230 = vadd.f32 %v2027, %v2047
    %v2231 = vadd.f32 %v2028, %v2047
    %v2232 = vadd.f32 %v2029, %v2047
    %v2233 = vadd.f32 %v2030, %v2047
    %v2234 = vadd.f32 %v2031, %v2047
    %v2235 = vadd.f32 %v2032, %v2047
    %v2236 = vadd.f32 %v2033, %v2047
    %v2237 = vadd.f32 %v2034, %v2047
    %v2238 = vadd.f32 %v2035, %v2047
    %v2239 = vadd.f32 %v2036, %v2047
    %v2240 = vadd.f32 %v2037, %v2047
    %v2241 = vadd.f32 %v2038, %v2047
    %v2242 = vadd.f32 %v2039, %v2047
    %v2243 = vadd.f32 %v2040, %v2047
    %v2244 = vadd.f32 %v2041, %v2047
    %v2245 = vmax.f32 %v2049, 0.0
    %v2246 = vmax.f32 %v2050, 0.0
    %v2247 = vmax.f32 %v2051, 0.0
    %v2248 = vmax.f32 %v2052, 0.0
    %v2249 = vmax.f32 %v2053, 0.0
    %v2250 = vmax.f32 %v2054, 0.0
    %v2251 = vmax.f32 %v2055, 0.0
    %v2252 = vmax.f32 %v2056, 0.0
    %v2253 = vmax.f32 %v2057, 0.0
    %v2254 = vmax.f32 %v2058, 0.0
    %v2255 = vmax.f32 %v2059, 0.0
    %v2256 = vmax.f32 %v2060, 0.0
    %v2257 = vmax.f32 %v2061, 0.0
    %v2258 = vmax.f32 %v2062, 0.0
    %v2259 = vmax.f32 %v2063, 0.0
    %v2260 = vmax.f32 %v2064, 0.0
    %v2261 = vmax.f32 %v2065, 0.0
    %v2262 = vmax.f32 %v2066, 0.0
    %v2263 = vmax.f32 %v2067, 0.0
    %v2264 = vmax.f32 %v2068, 0.0
    %v2265 = vmax.f32 %v2069, 0.0
    %v2266 = vmax.f32 %v2070, 0.0
    %v2267 = vmax.f32 %v2071, 0.0
    %v2268 = vmax.f32 %v2072, 0.0
    %v2269 = vmax.f32 %v2073, 0.0
    %v2270 = vmax.f32 %v2074, 0.0
    %v2271 = vmax.f32 %v2075, 0.0
    %v2272 = vmax.f32 %v2076, 0.0
    %v2273 = vmax.f32 %v2077, 0.0
    %v2274 = vmax.f32 %v2078, 0.0
    %v2275 = vmax.f32 %v2079, 0.0
    %v2276 = vmax.f32 %v2080, 0.0
    %v2277 = vmax.f32 %v2081, 0.0
    %v2278 = vmax.f32 %v2082, 0.0
    %v2279 = vmax.f32 %v2083, 0.0
    %v2280 = vmax.f32 %v2084, 0.0
    %v2281 = vmax.f32 %v2085, 0.0
    %v2282 = vmax.f32 %v2086, 0.0
    %v2283 = vmax.f32 %v2087, 0.0
    %v2284 = vmax.f32 %v2088, 0.0
    %v2285 = vmax.f32 %v2089, 0.0
    %v2286 = vmax.f32 %v2090, 0.0
    %v2287 = vmax.f32 %v2091, 0.0
    %v2288 = vmax.f32 %v2092, 0.0
    %v2289 = vmax.f32 %v2093, 0.0
    %v2290 = vmax.f32 %v2094, 0.0
    %v2291 = vmax.f32 %v2095, 0.0
    %v2292 = vmax.f32 %v2096, 0.0
    %v2293 = vmax.f32 %v2097, 0.0
    %v2294 = vmax.f32 %v2098, 0.0
    %v2295 = vmax.f32 %v2099, 0.0
    %v2296 = vmax.f32 %v2100, 0.0
    %v2297 = vmax.f32 %v2101, 0.0
    %v2298 = vmax.f32 %v2102, 0.0
    %v2299 = vmax.f32 %v2103, 0.0
    %v2300 = vmax.f32 %v2104, 0.0
    %v2301 = vmax.f32 %v2105, 0.0
    %v2302 = vmax.f32 %v2106, 0.0
    %v2303 = vmax.f32 %v2107, 0.0
    %v2304 = vmax.f32 %v2108, 0.0
    %v2305 = vmax.f32 %v2109, 0.0
    %v2306 = vmax.f32 %v2110, 0.0
    %v2307 = vmax.f32 %v2111, 0.0
    %v2308 = vmax.f32 %v2112, 0.0
    %v2309 = vmax.f32 %v2113, 0.0
    %v2310 = vmax.f32 %v2114, 0.0
    %v2311 = vmax.f32 %v2115, 0.0
    %v2312 = vmax.f32 %v2116, 0.0
    %v2313 = vmax.f32 %v2117, 0.0
    %v2314 = vmax.f32 %v2118, 0.0
    %v2315 = vmax.f32 %v2119, 0.0
    %v2316 = vmax.f32 %v2120, 0.0
    %v2317 = vmax.f32 %v2121, 0.0
    %v2318 = vmax.f32 %v2122, 0.0
    %v2319 = vmax.f32 %v2123, 0.0
    %v2320 = vmax.f32 %v2124, 0.0
    %v2321 = vmax.f32 %v2125, 0.0
    %v2322 = vmax.f32 %v2126, 0.0
    %v2323 = vmax.f32 %v2127, 0.0
    %v2324 = vmax.f32 %v2128, 0.0
    %v2325 = vmax.f32 %v2129, 0.0
    %v2326 = vmax.f32 %v2130, 0.0
    %v2327 = vmax.f32 %v2131, 0.0
    %v2328 = vmax.f32 %v2132, 0.0
    %v2329 = vmax.f32 %v2133, 0.0
    %v2330 = vmax.f32 %v2134, 0.0
    %v2331 = vmax.f32 %v2135, 0.0
    %v2332 = vmax.f32 %v2136, 0.0
    %v2333 = vmax.f32 %v2137, 0.0
    %v2334 = vmax.f32 %v2138, 0.0
    %v2335 = vmax.f32 %v2139, 0.0
    %v2336 = vmax.f32 %v2140, 0.0
    %v2337 = vmax.f32 %v2141, 0.0
    %v2338 = vmax.f32 %v2142, 0.0
    %v2339 = vmax.f32 %v2143, 0.0
    %v2340 = vmax.f32 %v2144, 0.0
    %v2341 = vmax.f32 %v2145, 0.0
    %v2342 = vmax.f32 %v2146, 0.0
    %v2343 = vmax.f32 %v2147, 0.0
    %v2344 = vmax.f32 %v2148, 0.0
    %v2345 = vmax.f32 %v2149, 0.0
    %v2346 = vmax.f32 %v2150, 0.0
    %v2347 = vmax.f32 %v2151, 0.0
    %v2348 = vmax.f32 %v2152, 0.0
    %v2349 = vmax.f32 %v2153, 0.0
    %v2350 = vmax.f32 %v2154, 0.0
    %v2351 = vmax.f32 %v2155, 0.0
    %v2352 = vmax.f32 %v2156, 0.0
    %v2353 = vmax.f32 %v2157, 0.0
    %v2354 = vmax.f32 %v2158, 0.0
    %v2355 = vmax.f32 %v2159, 0.0
    %v2356 = vmax.f32 %v2160, 0.0
    %v2357 = vmax.f32 %v2161, 0.0
    %v2358 = vmax.f32 %v2162, 0.0
    %v2359 = vmax.f32 %v2163, 0.0
    %v2360 = vmax.f32 %v2164, 0.0
    %v2361 = vmax.f32 %v2165, 0.0
    %v2362 = vmax.f32 %v2166, 0.0
    %v2363 = vmax.f32 %v2167, 0.0
    %v2364 = vmax.f32 %v2168, 0.0
    %v2365 = vmax.f32 %v2169, 0.0
    %v2366 = vmax.f32 %v2170, 0.0
    %v2367 = vmax.f32 %v2171, 0.0
    %v2368 = vmax.f32 %v2172, 0.0
    %v2369 = vmax.f32 %v2173, 0.0
    %v2370 = vmax.f32 %v2174, 0.0
    %v2371 = vmax.f32 %v2175, 0.0
    %v2372 = vmax.f32 %v2176, 0.0
    %v2373 = vmax.f32 %v2177, 0.0
    %v2374 = vmax.f32 %v2178, 0.0
    %v2375 = vmax.f32 %v2179, 0.0
    %v2376 = vmax.f32 %v2180, 0.0
    %v2377 = vmax.f32 %v2181, 0.0
    %v2378 = vmax.f32 %v2182, 0.0
    %v2379 = vmax.f32 %v2183, 0.0
    %v2380 = vmax.f32 %v2184, 0.0
    %v2381 = vmax.f32 %v2185, 0.0
    %v2382 = vmax.f32 %v2186, 0.0
    %v2383 = vmax.f32 %v2187, 0.0
    %v2384 = vmax.f32 %v2188, 0.0
    %v2385 = vmax.f32 %v2189, 0.0
    %v2386 = vmax.f32 %v2190, 0.0
    %v2387 = vmax.f32 %v2191, 0.0
    %v2388 = vmax.f32 %v2192, 0.0
    %v2389 = vmax.f32 %v2193, 0.0
    %v2390 = vmax.f32 %v2194, 0.0
    %v2391 = vmax.f32 %v2195, 0.0
    %v2392 = vmax.f32 %v2196, 0.0
    %v2393 = vmax.f32 %v2197, 0.0
    %v2394 = vmax.f32 %v2198, 0.0
    %v2395 = vmax.f32 %v2199, 0.0
    %v2396 = vmax.f32 %v2200, 0.0
    %v2397 = vmax.f32 %v2201, 0.0
    %v2398 = vmax.f32 %v2202, 0.0
    %v2399 = vmax.f32 %v2203, 0.0
    %v2400 = vmax.f32 %v2204, 0.0
    %v2401 = vmax.f32 %v2205, 0.0
    %v2402 = vmax.f32 %v2206, 0.0
    %v2403 = vmax.f32 %v2207, 0.0
    %v2404 = vmax.f32 %v2208, 0.0
    %v2405 = vmax.f32 %v2209, 0.0
    %v2406 = vmax.f32 %v2210, 0.0
    %v2407 = vmax.f32 %v2211, 0.0
    %v2408 = vmax.f32 %v2212, 0.0
    %v2409 = vmax.f32 %v2213, 0.0
    %v2410 = vmax.f32 %v2214, 0.0
    %v2411 = vmax.f32 %v2215, 0.0
    %v2412 = vmax.f32 %v2216, 0.0
    %v2413 = vmax.f32 %v2217, 0.0
    %v2414 = vmax.f32 %v2218, 0.0
    %v2415 = vmax.f32 %v2219, 0.0
    %v2416 = vmax.f32 %v2220, 0.0
    %v2417 = vmax.f32 %v2221, 0.0
    %v2418 = vmax.f32 %v2222, 0.0
    %v2419 = vmax.f32 %v2223, 0.0
    %v2420 = vmax.f32 %v2224, 0.0
    %v2421 = vmax.f32 %v2225, 0.0
    %v2422 = vmax.f32 %v2226, 0.0
    %v2423 = vmax.f32 %v2227, 0.0
    %v2424 = vmax.f32 %v2228, 0.0
    %v2425 = vmax.f32 %v2229, 0.0
    %v2426 = vmax.f32 %v2230, 0.0
    %v2427 = vmax.f32 %v2231, 0.0
    %v2428 = vmax.f32 %v2232, 0.0
    %v2429 = vmax.f32 %v2233, 0.0
    %v2430 = vmax.f32 %v2234, 0.0
    %v2431 = vmax.f32 %v2235, 0.0
    %v2432 = vmax.f32 %v2236, 0.0
    %v2433 = vmax.f32 %v2237, 0.0
    %v2434 = vmax.f32 %v2238, 0.0
    %v2435 = vmax.f32 %v2239, 0.0
    %v2436 = vmax.f32 %v2240, 0.0
    %v2437 = vmax.f32 %v2241, 0.0
    %v2438 = vmax.f32 %v2242, 0.0
    %v2439 = vmax.f32 %v2243, 0.0
    %v2440 = vmax.f32 %v2244, 0.0
    %v2441 = vpack.c.bf16 %v2246, %v2245
    %v2442 = vpack.c.bf16 %v2248, %v2247
    %v2443 = vpack.c.bf16 %v2250, %v2249
    %v2444 = vpack.c.bf16 %v2252, %v2251
    %v2445 = vpack.c.bf16 %v2254, %v2253
    %v2446 = vpack.c.bf16 %v2256, %v2255
    %v2447 = vpack.c.bf16 %v2258, %v2257
    %v2448 = vpack.c.bf16 %v2260, %v2259
    %v2449 = vpack.c.bf16 %v2262, %v2261
    %v2450 = vpack.c.bf16 %v2264, %v2263
    %v2451 = vpack.c.bf16 %v2266, %v2265
    %v2452 = vpack.c.bf16 %v2268, %v2267
    %v2453 = vpack.c.bf16 %v2270, %v2269
    %v2454 = vpack.c.bf16 %v2272, %v2271
    %v2455 = vpack.c.bf16 %v2274, %v2273
    %v2456 = vpack.c.bf16 %v2276, %v2275
    %v2457 = vpack.c.bf16 %v2278, %v2277
    %v2458 = vpack.c.bf16 %v2280, %v2279
    %v2459 = vpack.c.bf16 %v2282, %v2281
    %v2460 = vpack.c.bf16 %v2284, %v2283
    %v2461 = vpack.c.bf16 %v2286, %v2285
    %v2462 = vpack.c.bf16 %v2288, %v2287
    %v2463 = vpack.c.bf16 %v2290, %v2289
    %v2464 = vpack.c.bf16 %v2292, %v2291
    %v2465 = vpack.c.bf16 %v2294, %v2293
    %v2466 = vpack.c.bf16 %v2296, %v2295
    %v2467 = vpack.c.bf16 %v2298, %v2297
    %v2468 = vpack.c.bf16 %v2300, %v2299
    %v2469 = vpack.c.bf16 %v2302, %v2301
    %v2470 = vpack.c.bf16 %v2304, %v2303
    %v2471 = vpack.c.bf16 %v2306, %v2305
    %v2472 = vpack.c.bf16 %v2308, %v2307
    %v2473 = vpack.c.bf16 %v2310, %v2309
    %v2474 = vpack.c.bf16 %v2312, %v2311
    %v2475 = vpack.c.bf16 %v2314, %v2313
    %v2476 = vpack.c.bf16 %v2316, %v2315
    %v2477 = vpack.c.bf16 %v2318, %v2317
    %v2478 = vpack.c.bf16 %v2320, %v2319
    %v2479 = vpack.c.bf16 %v2322, %v2321
    %v2480 = vpack.c.bf16 %v2324, %v2323
    %v2481 = vpack.c.bf16 %v2326, %v2325
    %v2482 = vpack.c.bf16 %v2328, %v2327
    %v2483 = vpack.c.bf16 %v2330, %v2329
    %v2484 = vpack.c.bf16 %v2332, %v2331
    %v2485 = vpack.c.bf16 %v2334, %v2333
    %v2486 = vpack.c.bf16 %v2336, %v2335
    %v2487 = vpack.c.bf16 %v2338, %v2337
    %v2488 = vpack.c.bf16 %v2340, %v2339
    %v2489 = vpack.c.bf16 %v2342, %v2341
    %v2490 = vpack.c.bf16 %v2344, %v2343
    %v2491 = vpack.c.bf16 %v2346, %v2345
    %v2492 = vpack.c.bf16 %v2348, %v2347
    %v2493 = vpack.c.bf16 %v2350, %v2349
    %v2494 = vpack.c.bf16 %v2352, %v2351
    %v2495 = vpack.c.bf16 %v2354, %v2353
    %v2496 = vpack.c.bf16 %v2356, %v2355
    %v2497 = vpack.c.bf16 %v2358, %v2357
    %v2498 = vpack.c.bf16 %v2360, %v2359
    %v2499 = vpack.c.bf16 %v2362, %v2361
    %v2500 = vpack.c.bf16 %v2364, %v2363
    %v2501 = vpack.c.bf16 %v2366, %v2365
    %v2502 = vpack.c.bf16 %v2368, %v2367
    %v2503 = vpack.c.bf16 %v2370, %v2369
    %v2504 = vpack.c.bf16 %v2372, %v2371
    %v2505 = vpack.c.bf16 %v2374, %v2373
    %v2506 = vpack.c.bf16 %v2376, %v2375
    %v2507 = vpack.c.bf16 %v2378, %v2377
    %v2508 = vpack.c.bf16 %v2380, %v2379
    %v2509 = vpack.c.bf16 %v2382, %v2381
    %v2510 = vpack.c.bf16 %v2384, %v2383
    %v2511 = vpack.c.bf16 %v2386, %v2385
    %v2512 = vpack.c.bf16 %v2388, %v2387
    %v2513 = vpack.c.bf16 %v2390, %v2389
    %v2514 = vpack.c.bf16 %v2392, %v2391
    %v2515 = vpack.c.bf16 %v2394, %v2393
    %v2516 = vpack.c.bf16 %v2396, %v2395
    %v2517 = vpack.c.bf16 %v2398, %v2397
    %v2518 = vpack.c.bf16 %v2400, %v2399
    %v2519 = vpack.c.bf16 %v2402, %v2401
    %v2520 = vpack.c.bf16 %v2404, %v2403
    %v2521 = vpack.c.bf16 %v2406, %v2405
    %v2522 = vpack.c.bf16 %v2408, %v2407
    %v2523 = vpack.c.bf16 %v2410, %v2409
    %v2524 = vpack.c.bf16 %v2412, %v2411
    %v2525 = vpack.c.bf16 %v2414, %v2413
    %v2526 = vpack.c.bf16 %v2416, %v2415
    %v2527 = vpack.c.bf16 %v2418, %v2417
    %v2528 = vpack.c.bf16 %v2420, %v2419
    %v2529 = vpack.c.bf16 %v2422, %v2421
    %v2530 = vpack.c.bf16 %v2424, %v2423
    %v2531 = vpack.c.bf16 %v2426, %v2425
    %v2532 = vpack.c.bf16 %v2428, %v2427
    %v2533 = vpack.c.bf16 %v2430, %v2429
    %v2534 = vpack.c.bf16 %v2432, %v2431
    %v2535 = vpack.c.bf16 %v2434, %v2433
    %v2536 = vpack.c.bf16 %v2436, %v2435
    %v2537 = vpack.c.bf16 %v2438, %v2437
    %v2538 = vpack.c.bf16 %v2440, %v2439
    %v2637 = vunpack.c.l.b16 %v2441
    %v2638 = vunpack.c.h.b16 %v2441
    %v2639 = vunpack.c.l.b16 %v2442
    %v2640 = vunpack.c.h.b16 %v2442
    %v2641 = vunpack.c.l.b16 %v2443
    %v2642 = vunpack.c.h.b16 %v2443
    %v2643 = vunpack.c.l.b16 %v2444
    %v2644 = vunpack.c.h.b16 %v2444
    %v2645 = vunpack.c.l.b16 %v2445
    %v2646 = vunpack.c.h.b16 %v2445
    %v2647 = vunpack.c.l.b16 %v2446
    %v2648 = vunpack.c.h.b16 %v2446
    %v2649 = vunpack.c.l.b16 %v2447
    %v2650 = vunpack.c.h.b16 %v2447
    %v2651 = vunpack.c.l.b16 %v2448
    %v2652 = vunpack.c.h.b16 %v2448
    %v2653 = vunpack.c.l.b16 %v2449
    %v2654 = vunpack.c.h.b16 %v2449
    %v2655 = vunpack.c.l.b16 %v2450
    %v2656 = vunpack.c.h.b16 %v2450
    %v2657 = vunpack.c.l.b16 %v2451
    %v2658 = vunpack.c.h.b16 %v2451
    %v2659 = vunpack.c.l.b16 %v2452
    %v2660 = vunpack.c.h.b16 %v2452
    %v2661 = vunpack.c.l.b16 %v2453
    %v2662 = vunpack.c.h.b16 %v2453
    %v2663 = vunpack.c.l.b16 %v2454
    %v2664 = vunpack.c.h.b16 %v2454
    %v2665 = vunpack.c.l.b16 %v2455
    %v2666 = vunpack.c.h.b16 %v2455
    %v2667 = vunpack.c.l.b16 %v2456
    %v2668 = vunpack.c.h.b16 %v2456
    %v2669 = vunpack.c.l.b16 %v2457
    %v2670 = vunpack.c.h.b16 %v2457
    %v2671 = vunpack.c.l.b16 %v2458
    %v2672 = vunpack.c.h.b16 %v2458
    %v2673 = vunpack.c.l.b16 %v2459
    %v2674 = vunpack.c.h.b16 %v2459
    %v2675 = vunpack.c.l.b16 %v2460
    %v2676 = vunpack.c.h.b16 %v2460
    %v2677 = vunpack.c.l.b16 %v2461
    %v2678 = vunpack.c.h.b16 %v2461
    %v2679 = vunpack.c.l.b16 %v2462
    %v2680 = vunpack.c.h.b16 %v2462
    %v2681 = vunpack.c.l.b16 %v2463
    %v2682 = vunpack.c.h.b16 %v2463
    %v2683 = vunpack.c.l.b16 %v2464
    %v2684 = vunpack.c.h.b16 %v2464
    %v2685 = vunpack.c.l.b16 %v2465
    %v2686 = vunpack.c.h.b16 %v2465
    %v2687 = vunpack.c.l.b16 %v2466
    %v2688 = vunpack.c.h.b16 %v2466
    %v2689 = vunpack.c.l.b16 %v2467
    %v2690 = vunpack.c.h.b16 %v2467
    %v2691 = vunpack.c.l.b16 %v2468
    %v2692 = vunpack.c.h.b16 %v2468
    %v2693 = vunpack.c.l.b16 %v2469
    %v2694 = vunpack.c.h.b16 %v2469
    %v2695 = vunpack.c.l.b16 %v2470
    %v2696 = vunpack.c.h.b16 %v2470
    %v2697 = vunpack.c.l.b16 %v2471
    %v2698 = vunpack.c.h.b16 %v2471
    %v2699 = vunpack.c.l.b16 %v2472
    %v2700 = vunpack.c.h.b16 %v2472
    %v2701 = vunpack.c.l.b16 %v2473
    %v2702 = vunpack.c.h.b16 %v2473
    %v2703 = vunpack.c.l.b16 %v2474
    %v2704 = vunpack.c.h.b16 %v2474
    %v2705 = vunpack.c.l.b16 %v2475
    %v2706 = vunpack.c.h.b16 %v2475
    %v2707 = vunpack.c.l.b16 %v2476
    %v2708 = vunpack.c.h.b16 %v2476
    %v2709 = vunpack.c.l.b16 %v2477
    %v2710 = vunpack.c.h.b16 %v2477
    %v2711 = vunpack.c.l.b16 %v2478
    %v2712 = vunpack.c.h.b16 %v2478
    %v2713 = vunpack.c.l.b16 %v2479
    %v2714 = vunpack.c.h.b16 %v2479
    %v2715 = vunpack.c.l.b16 %v2480
    %v2716 = vunpack.c.h.b16 %v2480
    %v2717 = vunpack.c.l.b16 %v2481
    %v2718 = vunpack.c.h.b16 %v2481
    %v2719 = vunpack.c.l.b16 %v2482
    %v2720 = vunpack.c.h.b16 %v2482
    %v2721 = vunpack.c.l.b16 %v2483
    %v2722 = vunpack.c.h.b16 %v2483
    %v2723 = vunpack.c.l.b16 %v2484
    %v2724 = vunpack.c.h.b16 %v2484
    %v2725 = vunpack.c.l.b16 %v2485
    %v2726 = vunpack.c.h.b16 %v2485
    %v2727 = vunpack.c.l.b16 %v2486
    %v2728 = vunpack.c.h.b16 %v2486
    %v2729 = vunpack.c.l.b16 %v2487
    %v2730 = vunpack.c.h.b16 %v2487
    %v2731 = vunpack.c.l.b16 %v2488
    %v2732 = vunpack.c.h.b16 %v2488
    %v2733 = vunpack.c.l.b16 %v2489
    %v2734 = vunpack.c.h.b16 %v2489
    %v2735 = vunpack.c.l.b16 %v2490
    %v2736 = vunpack.c.h.b16 %v2490
    %v2737 = vunpack.c.l.b16 %v2491
    %v2738 = vunpack.c.h.b16 %v2491
    %v2739 = vunpack.c.l.b16 %v2492
    %v2740 = vunpack.c.h.b16 %v2492
    %v2741 = vunpack.c.l.b16 %v2493
    %v2742 = vunpack.c.h.b16 %v2493
    %v2743 = vunpack.c.l.b16 %v2494
    %v2744 = vunpack.c.h.b16 %v2494
    %v2745 = vunpack.c.l.b16 %v2495
    %v2746 = vunpack.c.h.b16 %v2495
    %v2747 = vunpack.c.l.b16 %v2496
    %v2748 = vunpack.c.h.b16 %v2496
    %v2749 = vunpack.c.l.b16 %v2497
    %v2750 = vunpack.c.h.b16 %v2497
    %v2751 = vunpack.c.l.b16 %v2498
    %v2752 = vunpack.c.h.b16 %v2498
    %v2753 = vunpack.c.l.b16 %v2499
    %v2754 = vunpack.c.h.b16 %v2499
    %v2755 = vunpack.c.l.b16 %v2500
    %v2756 = vunpack.c.h.b16 %v2500
    %v2757 = vunpack.c.l.b16 %v2501
    %v2758 = vunpack.c.h.b16 %v2501
    %v2759 = vunpack.c.l.b16 %v2502
    %v2760 = vunpack.c.h.b16 %v2502
    %v2761 = vunpack.c.l.b16 %v2503
    %v2762 = vunpack.c.h.b16 %v2503
    %v2763 = vunpack.c.l.b16 %v2504
    %v2764 = vunpack.c.h.b16 %v2504
    %v2765 = vunpack.c.l.b16 %v2505
    %v2766 = vunpack.c.h.b16 %v2505
    %v2767 = vunpack.c.l.b16 %v2506
    %v2768 = vunpack.c.h.b16 %v2506
    %v2769 = vunpack.c.l.b16 %v2507
    %v2770 = vunpack.c.h.b16 %v2507
    %v2771 = vunpack.c.l.b16 %v2508
    %v2772 = vunpack.c.h.b16 %v2508
    %v2773 = vunpack.c.l.b16 %v2509
    %v2774 = vunpack.c.h.b16 %v2509
    %v2775 = vunpack.c.l.b16 %v2510
    %v2776 = vunpack.c.h.b16 %v2510
    %v2777 = vunpack.c.l.b16 %v2511
    %v2778 = vunpack.c.h.b16 %v2511
    %v2779 = vunpack.c.l.b16 %v2512
    %v2780 = vunpack.c.h.b16 %v2512
    %v2781 = vunpack.c.l.b16 %v2513
    %v2782 = vunpack.c.h.b16 %v2513
    %v2783 = vunpack.c.l.b16 %v2514
    %v2784 = vunpack.c.h.b16 %v2514
    %v2785 = vunpack.c.l.b16 %v2515
    %v2786 = vunpack.c.h.b16 %v2515
    %v2787 = vunpack.c.l.b16 %v2516
    %v2788 = vunpack.c.h.b16 %v2516
    %v2789 = vunpack.c.l.b16 %v2517
    %v2790 = vunpack.c.h.b16 %v2517
    %v2791 = vunpack.c.l.b16 %v2518
    %v2792 = vunpack.c.h.b16 %v2518
    %v2793 = vunpack.c.l.b16 %v2519
    %v2794 = vunpack.c.h.b16 %v2519
    %v2795 = vunpack.c.l.b16 %v2520
    %v2796 = vunpack.c.h.b16 %v2520
    %v2797 = vunpack.c.l.b16 %v2521
    %v2798 = vunpack.c.h.b16 %v2521
    %v2799 = vunpack.c.l.b16 %v2522
    %v2800 = vunpack.c.h.b16 %v2522
    %v2801 = vunpack.c.l.b16 %v2523
    %v2802 = vunpack.c.h.b16 %v2523
    %v2803 = vunpack.c.l.b16 %v2524
    %v2804 = vunpack.c.h.b16 %v2524
    %v2805 = vunpack.c.l.b16 %v2525
    %v2806 = vunpack.c.h.b16 %v2525
    %v2807 = vunpack.c.l.b16 %v2526
    %v2808 = vunpack.c.h.b16 %v2526
    %v2809 = vunpack.c.l.b16 %v2527
    %v2810 = vunpack.c.h.b16 %v2527
    %v2811 = vunpack.c.l.b16 %v2528
    %v2812 = vunpack.c.h.b16 %v2528
    %v2813 = vunpack.c.l.b16 %v2529
    %v2814 = vunpack.c.h.b16 %v2529
    %v2815 = vunpack.c.l.b16 %v2530
    %v2816 = vunpack.c.h.b16 %v2530
    %v2817 = vunpack.c.l.b16 %v2531
    %v2818 = vunpack.c.h.b16 %v2531
    %v2819 = vunpack.c.l.b16 %v2532
    %v2820 = vunpack.c.h.b16 %v2532
    %v2821 = vunpack.c.l.b16 %v2533
    %v2822 = vunpack.c.h.b16 %v2533
    %v2823 = vunpack.c.l.b16 %v2534
    %v2824 = vunpack.c.h.b16 %v2534
    %v2825 = vunpack.c.l.b16 %v2535
    %v2826 = vunpack.c.h.b16 %v2535
    %v2827 = vunpack.c.l.b16 %v2536
    %v2828 = vunpack.c.h.b16 %v2536
    %v2829 = vunpack.c.l.b16 %v2537
    %v2830 = vunpack.c.h.b16 %v2537
    %v2831 = vunpack.c.l.b16 %v2538
    %v2832 = vunpack.c.h.b16 %v2538
    %v2833 = vpack.c.b16 %v2637, %v2637
    %v2834 = vpack.c.b16 %v2638, %v2638
    %v2835 = vpack.c.b16 %v2639, %v2639
    %v2836 = vpack.c.b16 %v2640, %v2640
    %v2837 = vpack.c.b16 %v2641, %v2641
    %v2838 = vpack.c.b16 %v2642, %v2642
    %v2839 = vpack.c.b16 %v2643, %v2643
    %v2840 = vpack.c.b16 %v2644, %v2644
    %v2841 = vpack.c.b16 %v2645, %v2645
    %v2842 = vpack.c.b16 %v2646, %v2646
    %v2843 = vpack.c.b16 %v2647, %v2647
    %v2844 = vpack.c.b16 %v2648, %v2648
    %v2845 = vpack.c.b16 %v2649, %v2649
    %v2846 = vpack.c.b16 %v2650, %v2650
    %v2847 = vpack.c.b16 %v2651, %v2651
    %v2848 = vpack.c.b16 %v2652, %v2652
    %v2849 = vpack.c.b16 %v2653, %v2653
    %v2850 = vpack.c.b16 %v2654, %v2654
    %v2851 = vpack.c.b16 %v2655, %v2655
    %v2852 = vpack.c.b16 %v2656, %v2656
    %v2853 = vpack.c.b16 %v2657, %v2657
    %v2854 = vpack.c.b16 %v2658, %v2658
    %v2855 = vpack.c.b16 %v2659, %v2659
    %v2856 = vpack.c.b16 %v2660, %v2660
    %v2857 = vpack.c.b16 %v2661, %v2661
    %v2858 = vpack.c.b16 %v2662, %v2662
    %v2859 = vpack.c.b16 %v2663, %v2663
    %v2860 = vpack.c.b16 %v2664, %v2664
    %v2861 = vpack.c.b16 %v2665, %v2665
    %v2862 = vpack.c.b16 %v2666, %v2666
    %v2863 = vpack.c.b16 %v2667, %v2667
    %v2864 = vpack.c.b16 %v2668, %v2668
    %v2865 = vpack.c.b16 %v2669, %v2669
    %v2866 = vpack.c.b16 %v2670, %v2670
    %v2867 = vpack.c.b16 %v2671, %v2671
    %v2868 = vpack.c.b16 %v2672, %v2672
    %v2869 = vpack.c.b16 %v2673, %v2673
    %v2870 = vpack.c.b16 %v2674, %v2674
    %v2871 = vpack.c.b16 %v2675, %v2675
    %v2872 = vpack.c.b16 %v2676, %v2676
    %v2873 = vpack.c.b16 %v2677, %v2677
    %v2874 = vpack.c.b16 %v2678, %v2678
    %v2875 = vpack.c.b16 %v2679, %v2679
    %v2876 = vpack.c.b16 %v2680, %v2680
    %v2877 = vpack.c.b16 %v2681, %v2681
    %v2878 = vpack.c.b16 %v2682, %v2682
    %v2879 = vpack.c.b16 %v2683, %v2683
    %v2880 = vpack.c.b16 %v2684, %v2684
    %v2881 = vpack.c.b16 %v2685, %v2685
    %v2882 = vpack.c.b16 %v2686, %v2686
    %v2883 = vpack.c.b16 %v2687, %v2687
    %v2884 = vpack.c.b16 %v2688, %v2688
    %v2885 = vpack.c.b16 %v2689, %v2689
    %v2886 = vpack.c.b16 %v2690, %v2690
    %v2887 = vpack.c.b16 %v2691, %v2691
    %v2888 = vpack.c.b16 %v2692, %v2692
    %v2889 = vpack.c.b16 %v2693, %v2693
    %v2890 = vpack.c.b16 %v2694, %v2694
    %v2891 = vpack.c.b16 %v2695, %v2695
    %v2892 = vpack.c.b16 %v2696, %v2696
    %v2893 = vpack.c.b16 %v2697, %v2697
    %v2894 = vpack.c.b16 %v2698, %v2698
    %v2895 = vpack.c.b16 %v2699, %v2699
    %v2896 = vpack.c.b16 %v2700, %v2700
    %v2897 = vpack.c.b16 %v2701, %v2701
    %v2898 = vpack.c.b16 %v2702, %v2702
    %v2899 = vpack.c.b16 %v2703, %v2703
    %v2900 = vpack.c.b16 %v2704, %v2704
    %v2901 = vpack.c.b16 %v2705, %v2705
    %v2902 = vpack.c.b16 %v2706, %v2706
    %v2903 = vpack.c.b16 %v2707, %v2707
    %v2904 = vpack.c.b16 %v2708, %v2708
    %v2905 = vpack.c.b16 %v2709, %v2709
    %v2906 = vpack.c.b16 %v2710, %v2710
    %v2907 = vpack.c.b16 %v2711, %v2711
    %v2908 = vpack.c.b16 %v2712, %v2712
    %v2909 = vpack.c.b16 %v2713, %v2713
    %v2910 = vpack.c.b16 %v2714, %v2714
    %v2911 = vpack.c.b16 %v2715, %v2715
    %v2912 = vpack.c.b16 %v2716, %v2716
    %v2913 = vpack.c.b16 %v2717, %v2717
    %v2914 = vpack.c.b16 %v2718, %v2718
    %v2915 = vpack.c.b16 %v2719, %v2719
    %v2916 = vpack.c.b16 %v2720, %v2720
    %v2917 = vpack.c.b16 %v2721, %v2721
    %v2918 = vpack.c.b16 %v2722, %v2722
    %v2919 = vpack.c.b16 %v2723, %v2723
    %v2920 = vpack.c.b16 %v2724, %v2724
    %v2921 = vpack.c.b16 %v2725, %v2725
    %v2922 = vpack.c.b16 %v2726, %v2726
    %v2923 = vpack.c.b16 %v2727, %v2727
    %v2924 = vpack.c.b16 %v2728, %v2728
    %v2925 = vpack.c.b16 %v2729, %v2729
    %v2926 = vpack.c.b16 %v2730, %v2730
    %v2927 = vpack.c.b16 %v2731, %v2731
    %v2928 = vpack.c.b16 %v2732, %v2732
    %v2929 = vpack.c.b16 %v2733, %v2733
    %v2930 = vpack.c.b16 %v2734, %v2734
    %v2931 = vpack.c.b16 %v2735, %v2735
    %v2932 = vpack.c.b16 %v2736, %v2736
    %v2933 = vpack.c.b16 %v2737, %v2737
    %v2934 = vpack.c.b16 %v2738, %v2738
    %v2935 = vpack.c.b16 %v2739, %v2739
    %v2936 = vpack.c.b16 %v2740, %v2740
    %v2937 = vpack.c.b16 %v2741, %v2741
    %v2938 = vpack.c.b16 %v2742, %v2742
    %v2939 = vpack.c.b16 %v2743, %v2743
    %v2940 = vpack.c.b16 %v2744, %v2744
    %v2941 = vpack.c.b16 %v2745, %v2745
    %v2942 = vpack.c.b16 %v2746, %v2746
    %v2943 = vpack.c.b16 %v2747, %v2747
    %v2944 = vpack.c.b16 %v2748, %v2748
    %v2945 = vpack.c.b16 %v2749, %v2749
    %v2946 = vpack.c.b16 %v2750, %v2750
    %v2947 = vpack.c.b16 %v2751, %v2751
    %v2948 = vpack.c.b16 %v2752, %v2752
    %v2949 = vpack.c.b16 %v2753, %v2753
    %v2950 = vpack.c.b16 %v2754, %v2754
    %v2951 = vpack.c.b16 %v2755, %v2755
    %v2952 = vpack.c.b16 %v2756, %v2756
    %v2953 = vpack.c.b16 %v2757, %v2757
    %v2954 = vpack.c.b16 %v2758, %v2758
    %v2955 = vpack.c.b16 %v2759, %v2759
    %v2956 = vpack.c.b16 %v2760, %v2760
    %v2957 = vpack.c.b16 %v2761, %v2761
    %v2958 = vpack.c.b16 %v2762, %v2762
    %v2959 = vpack.c.b16 %v2763, %v2763
    %v2960 = vpack.c.b16 %v2764, %v2764
    %v2961 = vpack.c.b16 %v2765, %v2765
    %v2962 = vpack.c.b16 %v2766, %v2766
    %v2963 = vpack.c.b16 %v2767, %v2767
    %v2964 = vpack.c.b16 %v2768, %v2768
    %v2965 = vpack.c.b16 %v2769, %v2769
    %v2966 = vpack.c.b16 %v2770, %v2770
    %v2967 = vpack.c.b16 %v2771, %v2771
    %v2968 = vpack.c.b16 %v2772, %v2772
    %v2969 = vpack.c.b16 %v2773, %v2773
    %v2970 = vpack.c.b16 %v2774, %v2774
    %v2971 = vpack.c.b16 %v2775, %v2775
    %v2972 = vpack.c.b16 %v2776, %v2776
    %v2973 = vpack.c.b16 %v2777, %v2777
    %v2974 = vpack.c.b16 %v2778, %v2778
    %v2975 = vpack.c.b16 %v2779, %v2779
    %v2976 = vpack.c.b16 %v2780, %v2780
    %v2977 = vpack.c.b16 %v2781, %v2781
    %v2978 = vpack.c.b16 %v2782, %v2782
    %v2979 = vpack.c.b16 %v2783, %v2783
    %v2980 = vpack.c.b16 %v2784, %v2784
    %v2981 = vpack.c.b16 %v2785, %v2785
    %v2982 = vpack.c.b16 %v2786, %v2786
    %v2983 = vpack.c.b16 %v2787, %v2787
    %v2984 = vpack.c.b16 %v2788, %v2788
    %v2985 = vpack.c.b16 %v2789, %v2789
    %v2986 = vpack.c.b16 %v2790, %v2790
    %v2987 = vpack.c.b16 %v2791, %v2791
    %v2988 = vpack.c.b16 %v2792, %v2792
    %v2989 = vpack.c.b16 %v2793, %v2793
    %v2990 = vpack.c.b16 %v2794, %v2794
    %v2991 = vpack.c.b16 %v2795, %v2795
    %v2992 = vpack.c.b16 %v2796, %v2796
    %v2993 = vpack.c.b16 %v2797, %v2797
    %v2994 = vpack.c.b16 %v2798, %v2798
    %v2995 = vpack.c.b16 %v2799, %v2799
    %v2996 = vpack.c.b16 %v2800, %v2800
    %v2997 = vpack.c.b16 %v2801, %v2801
    %v2998 = vpack.c.b16 %v2802, %v2802
    %v2999 = vpack.c.b16 %v2803, %v2803
    %v3000 = vpack.c.b16 %v2804, %v2804
    %v3001 = vpack.c.b16 %v2805, %v2805
    %v3002 = vpack.c.b16 %v2806, %v2806
    %v3003 = vpack.c.b16 %v2807, %v2807
    %v3004 = vpack.c.b16 %v2808, %v2808
    %v3005 = vpack.c.b16 %v2809, %v2809
    %v3006 = vpack.c.b16 %v2810, %v2810
    %v3007 = vpack.c.b16 %v2811, %v2811
    %v3008 = vpack.c.b16 %v2812, %v2812
    %v3009 = vpack.c.b16 %v2813, %v2813
    %v3010 = vpack.c.b16 %v2814, %v2814
    %v3011 = vpack.c.b16 %v2815, %v2815
    %v3012 = vpack.c.b16 %v2816, %v2816
    %v3013 = vpack.c.b16 %v2817, %v2817
    %v3014 = vpack.c.b16 %v2818, %v2818
    %v3015 = vpack.c.b16 %v2819, %v2819
    %v3016 = vpack.c.b16 %v2820, %v2820
    %v3017 = vpack.c.b16 %v2821, %v2821
    %v3018 = vpack.c.b16 %v2822, %v2822
    %v3019 = vpack.c.b16 %v2823, %v2823
    %v3020 = vpack.c.b16 %v2824, %v2824
    %v3021 = vpack.c.b16 %v2825, %v2825
    %v3022 = vpack.c.b16 %v2826, %v2826
    %v3023 = vpack.c.b16 %v2827, %v2827
    %v3024 = vpack.c.b16 %v2828, %v2828
    %v3025 = vpack.c.b16 %v2829, %v2829
    %v3026 = vpack.c.b16 %v2830, %v2830
    %v3027 = vpack.c.b16 %v2831, %v2831
    %v3028 = vpack.c.b16 %v2832, %v2832
    %3225 = vst [vmem:[#allocation2] sm:$0xf] %v2833
    %3226 = vst [vmem:[#allocation2 + $0x4] sm:$0xf] %v2834
    %3227 = vst [vmem:[#allocation2 + $0x8] sm:$0xf] %v2835
    %3228 = vst [vmem:[#allocation2 + $0xc] sm:$0xf] %v2836
    %3229 = vst [vmem:[#allocation2 + $0x10] sm:$0xf] %v2837
    %3230 = vst [vmem:[#allocation2 + $0x14] sm:$0xf] %v2838
    %3231 = vst [vmem:[#allocation2 + $0x18] sm:$0xf] %v2839
    %3232 = vst [vmem:[#allocation2 + $0x1c] sm:$0xf] %v2840
    %3233 = vst [vmem:[#allocation2 + $0x20] sm:$0xf] %v2841
    %3234 = vst [vmem:[#allocation2 + $0x24] sm:$0xf] %v2842
    %3235 = vst [vmem:[#allocation2 + $0x28] sm:$0xf] %v2843
    %3236 = vst [vmem:[#allocation2 + $0x2c] sm:$0xf] %v2844
    %3237 = vst [vmem:[#allocation2 + $0x30] sm:$0xf] %v2845
    %3238 = vst [vmem:[#allocation2 + $0x34] sm:$0xf] %v2846
    %3239 = vst [vmem:[#allocation2 + $0x38] sm:$0xf] %v2847
    %3240 = vst [vmem:[#allocation2 + $0x3c] sm:$0xf] %v2848
    %3241 = vst [vmem:[#allocation2 + $0x40] sm:$0xf] %v2849
    %3242 = vst [vmem:[#allocation2 + $0x44] sm:$0xf] %v2850
    %3243 = vst [vmem:[#allocation2 + $0x48] sm:$0xf] %v2851
    %3244 = vst [vmem:[#allocation2 + $0x4c] sm:$0xf] %v2852
    %3245 = vst [vmem:[#allocation2 + $0x50] sm:$0xf] %v2853
    %3246 = vst [vmem:[#allocation2 + $0x54] sm:$0xf] %v2854
    %3247 = vst [vmem:[#allocation2 + $0x58] sm:$0xf] %v2855
    %3248 = vst [vmem:[#allocation2 + $0x5c] sm:$0xf] %v2856
    %3249 = vst [vmem:[#allocation2 + $0x60] sm:$0xf] %v2857
    %3250 = vst [vmem:[#allocation2 + $0x64] sm:$0xf] %v2858
    %3251 = vst [vmem:[#allocation2 + $0x68] sm:$0xf] %v2859
    %3252 = vst [vmem:[#allocation2 + $0x6c] sm:$0xf] %v2860
    %3253 = vst [vmem:[#allocation2 + $0x70] sm:$0xf] %v2861
    %3254 = vst [vmem:[#allocation2 + $0x74] sm:$0xf] %v2862
    %3255 = vst [vmem:[#allocation2 + $0x78] sm:$0xf] %v2863
    %3256 = vst [vmem:[#allocation2 + $0x7c] sm:$0xf] %v2864
    %3257 = vst [vmem:[#allocation2 + $0x80] sm:$0xf] %v2865
    %3258 = vst [vmem:[#allocation2 + $0x84] sm:$0xf] %v2866
    %3259 = vst [vmem:[#allocation2 + $0x88] sm:$0xf] %v2867
    %3260 = vst [vmem:[#allocation2 + $0x8c] sm:$0xf] %v2868
    %3261 = vst [vmem:[#allocation2 + $0x90] sm:$0xf] %v2869
    %3262 = vst [vmem:[#allocation2 + $0x94] sm:$0xf] %v2870
    %3263 = vst [vmem:[#allocation2 + $0x98] sm:$0xf] %v2871
    %3264 = vst [vmem:[#allocation2 + $0x9c] sm:$0xf] %v2872
    %3265 = vst [vmem:[#allocation2 + $0xa0] sm:$0xf] %v2873
    %3266 = vst [vmem:[#allocation2 + $0xa4] sm:$0xf] %v2874
    %3267 = vst [vmem:[#allocation2 + $0xa8] sm:$0xf] %v2875
    %3268 = vst [vmem:[#allocation2 + $0xac] sm:$0xf] %v2876
    %3269 = vst [vmem:[#allocation2 + $0xb0] sm:$0xf] %v2877
    %3270 = vst [vmem:[#allocation2 + $0xb4] sm:$0xf] %v2878
    %3271 = vst [vmem:[#allocation2 + $0xb8] sm:$0xf] %v2879
    %3272 = vst [vmem:[#allocation2 + $0xbc] sm:$0xf] %v2880
    %3273 = vst [vmem:[#allocation2 + $0xc0] sm:$0xf] %v2881
    %3274 = vst [vmem:[#allocation2 + $0xc4] sm:$0xf] %v2882
    %3275 = vst [vmem:[#allocation2 + $0xc8] sm:$0xf] %v2883
    %3276 = vst [vmem:[#allocation2 + $0xcc] sm:$0xf] %v2884
    %3277 = vst [vmem:[#allocation2 + $0xd0] sm:$0xf] %v2885
    %3278 = vst [vmem:[#allocation2 + $0xd4] sm:$0xf] %v2886
    %3279 = vst [vmem:[#allocation2 + $0xd8] sm:$0xf] %v2887
    %3280 = vst [vmem:[#allocation2 + $0xdc] sm:$0xf] %v2888
    %3281 = vst [vmem:[#allocation2 + $0xe0] sm:$0xf] %v2889
    %3282 = vst [vmem:[#allocation2 + $0xe4] sm:$0xf] %v2890
    %3283 = vst [vmem:[#allocation2 + $0xe8] sm:$0xf] %v2891
    %3284 = vst [vmem:[#allocation2 + $0xec] sm:$0xf] %v2892
    %3285 = vst [vmem:[#allocation2 + $0xf0] sm:$0xf] %v2893
    %3286 = vst [vmem:[#allocation2 + $0xf4] sm:$0xf] %v2894
    %3287 = vst [vmem:[#allocation2 + $0xf8] sm:$0xf] %v2895
    %3288 = vst [vmem:[#allocation2 + $0xfc] sm:$0xf] %v2896
    %3289 = vst [vmem:[#allocation2 + $0x100] sm:$0xf] %v2897
    %3290 = vst [vmem:[#allocation2 + $0x104] sm:$0xf] %v2898
    %3291 = vst [vmem:[#allocation2 + $0x108] sm:$0xf] %v2899
    %3292 = vst [vmem:[#allocation2 + $0x10c] sm:$0xf] %v2900
    %3293 = vst [vmem:[#allocation2 + $0x110] sm:$0xf] %v2901
    %3294 = vst [vmem:[#allocation2 + $0x114] sm:$0xf] %v2902
    %3295 = vst [vmem:[#allocation2 + $0x118] sm:$0xf] %v2903
    %3296 = vst [vmem:[#allocation2 + $0x11c] sm:$0xf] %v2904
    %3297 = vst [vmem:[#allocation2 + $0x120] sm:$0xf] %v2905
    %3298 = vst [vmem:[#allocation2 + $0x124] sm:$0xf] %v2906
    %3299 = vst [vmem:[#allocation2 + $0x128] sm:$0xf] %v2907
    %3300 = vst [vmem:[#allocation2 + $0x12c] sm:$0xf] %v2908
    %3301 = vst [vmem:[#allocation2 + $0x130] sm:$0xf] %v2909
    %3302 = vst [vmem:[#allocation2 + $0x134] sm:$0xf] %v2910
    %3303 = vst [vmem:[#allocation2 + $0x138] sm:$0xf] %v2911
    %3304 = vst [vmem:[#allocation2 + $0x13c] sm:$0xf] %v2912
    %3305 = vst [vmem:[#allocation2 + $0x140] sm:$0xf] %v2913
    %3306 = vst [vmem:[#allocation2 + $0x144] sm:$0xf] %v2914
    %3307 = vst [vmem:[#allocation2 + $0x148] sm:$0xf] %v2915
    %3308 = vst [vmem:[#allocation2 + $0x14c] sm:$0xf] %v2916
    %3309 = vst [vmem:[#allocation2 + $0x150] sm:$0xf] %v2917
    %3310 = vst [vmem:[#allocation2 + $0x154] sm:$0xf] %v2918
    %3311 = vst [vmem:[#allocation2 + $0x158] sm:$0xf] %v2919
    %3312 = vst [vmem:[#allocation2 + $0x15c] sm:$0xf] %v2920
    %3313 = vst [vmem:[#allocation2 + $0x160] sm:$0xf] %v2921
    %3314 = vst [vmem:[#allocation2 + $0x164] sm:$0xf] %v2922
    %3315 = vst [vmem:[#allocation2 + $0x168] sm:$0xf] %v2923
    %3316 = vst [vmem:[#allocation2 + $0x16c] sm:$0xf] %v2924
    %3317 = vst [vmem:[#allocation2 + $0x170] sm:$0xf] %v2925
    %3318 = vst [vmem:[#allocation2 + $0x174] sm:$0xf] %v2926
    %3319 = vst [vmem:[#allocation2 + $0x178] sm:$0xf] %v2927
    %3320 = vst [vmem:[#allocation2 + $0x17c] sm:$0xf] %v2928
    %3321 = vst [vmem:[#allocation2 + $0x180] sm:$0xf] %v2929
    %3322 = vst [vmem:[#allocation2 + $0x184] sm:$0xf] %v2930
    %3323 = vst [vmem:[#allocation2 + $0x188] sm:$0xf] %v2931
    %3324 = vst [vmem:[#allocation2 + $0x18c] sm:$0xf] %v2932
    %3325 = vst [vmem:[#allocation2 + $0x190] sm:$0xf] %v2933
    %3326 = vst [vmem:[#allocation2 + $0x194] sm:$0xf] %v2934
    %3327 = vst [vmem:[#allocation2 + $0x198] sm:$0xf] %v2935
    %3328 = vst [vmem:[#allocation2 + $0x19c] sm:$0xf] %v2936
    %3329 = vst [vmem:[#allocation2 + $0x1a0] sm:$0xf] %v2937
    %3330 = vst [vmem:[#allocation2 + $0x1a4] sm:$0xf] %v2938
    %3331 = vst [vmem:[#allocation2 + $0x1a8] sm:$0xf] %v2939
    %3332 = vst [vmem:[#allocation2 + $0x1ac] sm:$0xf] %v2940
    %3333 = vst [vmem:[#allocation2 + $0x1b0] sm:$0xf] %v2941
    %3334 = vst [vmem:[#allocation2 + $0x1b4] sm:$0xf] %v2942
    %3335 = vst [vmem:[#allocation2 + $0x1b8] sm:$0xf] %v2943
    %3336 = vst [vmem:[#allocation2 + $0x1bc] sm:$0xf] %v2944
    %3337 = vst [vmem:[#allocation2 + $0x1c0] sm:$0xf] %v2945
    %3338 = vst [vmem:[#allocation2 + $0x1c4] sm:$0xf] %v2946
    %3339 = vst [vmem:[#allocation2 + $0x1c8] sm:$0xf] %v2947
    %3340 = vst [vmem:[#allocation2 + $0x1cc] sm:$0xf] %v2948
    %3341 = vst [vmem:[#allocation2 + $0x1d0] sm:$0xf] %v2949
    %3342 = vst [vmem:[#allocation2 + $0x1d4] sm:$0xf] %v2950
    %3343 = vst [vmem:[#allocation2 + $0x1d8] sm:$0xf] %v2951
    %3344 = vst [vmem:[#allocation2 + $0x1dc] sm:$0xf] %v2952
    %3345 = vst [vmem:[#allocation2 + $0x1e0] sm:$0xf] %v2953
    %3346 = vst [vmem:[#allocation2 + $0x1e4] sm:$0xf] %v2954
    %3347 = vst [vmem:[#allocation2 + $0x1e8] sm:$0xf] %v2955
    %3348 = vst [vmem:[#allocation2 + $0x1ec] sm:$0xf] %v2956
    %3349 = vst [vmem:[#allocation2 + $0x1f0] sm:$0xf] %v2957
    %3350 = vst [vmem:[#allocation2 + $0x1f4] sm:$0xf] %v2958
    %3351 = vst [vmem:[#allocation2 + $0x1f8] sm:$0xf] %v2959
    %3352 = vst [vmem:[#allocation2 + $0x1fc] sm:$0xf] %v2960
    %3353 = vst [vmem:[#allocation2 + $0x200] sm:$0xf] %v2961
    %3354 = vst [vmem:[#allocation2 + $0x204] sm:$0xf] %v2962
    %3355 = vst [vmem:[#allocation2 + $0x208] sm:$0xf] %v2963
    %3356 = vst [vmem:[#allocation2 + $0x20c] sm:$0xf] %v2964
    %3357 = vst [vmem:[#allocation2 + $0x210] sm:$0xf] %v2965
    %3358 = vst [vmem:[#allocation2 + $0x214] sm:$0xf] %v2966
    %3359 = vst [vmem:[#allocation2 + $0x218] sm:$0xf] %v2967
    %3360 = vst [vmem:[#allocation2 + $0x21c] sm:$0xf] %v2968
    %3361 = vst [vmem:[#allocation2 + $0x220] sm:$0xf] %v2969
    %3362 = vst [vmem:[#allocation2 + $0x224] sm:$0xf] %v2970
    %3363 = vst [vmem:[#allocation2 + $0x228] sm:$0xf] %v2971
    %3364 = vst [vmem:[#allocation2 + $0x22c] sm:$0xf] %v2972
    %3365 = vst [vmem:[#allocation2 + $0x230] sm:$0xf] %v2973
    %3366 = vst [vmem:[#allocation2 + $0x234] sm:$0xf] %v2974
    %3367 = vst [vmem:[#allocation2 + $0x238] sm:$0xf] %v2975
    %3368 = vst [vmem:[#allocation2 + $0x23c] sm:$0xf] %v2976
    %3369 = vst [vmem:[#allocation2 + $0x240] sm:$0xf] %v2977
    %3370 = vst [vmem:[#allocation2 + $0x244] sm:$0xf] %v2978
    %3371 = vst [vmem:[#allocation2 + $0x248] sm:$0xf] %v2979
    %3372 = vst [vmem:[#allocation2 + $0x24c] sm:$0xf] %v2980
    %3373 = vst [vmem:[#allocation2 + $0x250] sm:$0xf] %v2981
    %3374 = vst [vmem:[#allocation2 + $0x254] sm:$0xf] %v2982
    %3375 = vst [vmem:[#allocation2 + $0x258] sm:$0xf] %v2983
    %3376 = vst [vmem:[#allocation2 + $0x25c] sm:$0xf] %v2984
    %3377 = vst [vmem:[#allocation2 + $0x260] sm:$0xf] %v2985
    %3378 = vst [vmem:[#allocation2 + $0x264] sm:$0xf] %v2986
    %3379 = vst [vmem:[#allocation2 + $0x268] sm:$0xf] %v2987
    %3380 = vst [vmem:[#allocation2 + $0x26c] sm:$0xf] %v2988
    %3381 = vst [vmem:[#allocation2 + $0x270] sm:$0xf] %v2989
    %3382 = vst [vmem:[#allocation2 + $0x274] sm:$0xf] %v2990
    %3383 = vst [vmem:[#allocation2 + $0x278] sm:$0xf] %v2991
    %3384 = vst [vmem:[#allocation2 + $0x27c] sm:$0xf] %v2992
    %3385 = vst [vmem:[#allocation2 + $0x280] sm:$0xf] %v2993
    %3386 = vst [vmem:[#allocation2 + $0x284] sm:$0xf] %v2994
    %3387 = vst [vmem:[#allocation2 + $0x288] sm:$0xf] %v2995
    %3388 = vst [vmem:[#allocation2 + $0x28c] sm:$0xf] %v2996
    %3389 = vst [vmem:[#allocation2 + $0x290] sm:$0xf] %v2997
    %3390 = vst [vmem:[#allocation2 + $0x294] sm:$0xf] %v2998
    %3391 = vst [vmem:[#allocation2 + $0x298] sm:$0xf] %v2999
    %3392 = vst [vmem:[#allocation2 + $0x29c] sm:$0xf] %v3000
    %3393 = vst [vmem:[#allocation2 + $0x2a0] sm:$0xf] %v3001
    %3394 = vst [vmem:[#allocation2 + $0x2a4] sm:$0xf] %v3002
    %3395 = vst [vmem:[#allocation2 + $0x2a8] sm:$0xf] %v3003
    %3396 = vst [vmem:[#allocation2 + $0x2ac] sm:$0xf] %v3004
    %3397 = vst [vmem:[#allocation2 + $0x2b0] sm:$0xf] %v3005
    %3398 = vst [vmem:[#allocation2 + $0x2b4] sm:$0xf] %v3006
    %3399 = vst [vmem:[#allocation2 + $0x2b8] sm:$0xf] %v3007
    %3400 = vst [vmem:[#allocation2 + $0x2bc] sm:$0xf] %v3008
    %3401 = vst [vmem:[#allocation2 + $0x2c0] sm:$0xf] %v3009
    %3402 = vst [vmem:[#allocation2 + $0x2c4] sm:$0xf] %v3010
    %3403 = vst [vmem:[#allocation2 + $0x2c8] sm:$0xf] %v3011
    %3404 = vst [vmem:[#allocation2 + $0x2cc] sm:$0xf] %v3012
    %3405 = vst [vmem:[#allocation2 + $0x2d0] sm:$0xf] %v3013
    %3406 = vst [vmem:[#allocation2 + $0x2d4] sm:$0xf] %v3014
    %3407 = vst [vmem:[#allocation2 + $0x2d8] sm:$0xf] %v3015
    %3408 = vst [vmem:[#allocation2 + $0x2dc] sm:$0xf] %v3016
    %3409 = vst [vmem:[#allocation2 + $0x2e0] sm:$0xf] %v3017
    %3410 = vst [vmem:[#allocation2 + $0x2e4] sm:$0xf] %v3018
    %3411 = vst [vmem:[#allocation2 + $0x2e8] sm:$0xf] %v3019
    %3412 = vst [vmem:[#allocation2 + $0x2ec] sm:$0xf] %v3020
    %3413 = vst [vmem:[#allocation2 + $0x2f0] sm:$0xf] %v3021
    %3414 = vst [vmem:[#allocation2 + $0x2f4] sm:$0xf] %v3022
    %3415 = vst [vmem:[#allocation2 + $0x2f8] sm:$0xf] %v3023
    %3416 = vst [vmem:[#allocation2 + $0x2fc] sm:$0xf] %v3024
    %3417 = vst [vmem:[#allocation2 + $0x300] sm:$0xf] %v3025
    %3418 = vst [vmem:[#allocation2 + $0x304] sm:$0xf] %v3026
    %3419 = vst [vmem:[#allocation2 + $0x308] sm:$0xf] %v3027
    %3420 = vst [vmem:[#allocation2 + $0x30c] sm:$0xf] %v3028
    // Predicated region
    $region18: #{tpu_custom_call.1} parent=1 // pred_check
      _
    $region19: #{tpu_custom_call.1} parent=1 // pred_check_branch
      %3422 = sbr.rel (0) target = $region21
    $region20: #{tpu_custom_call.1} parent=1 // pred_region
      %s3424 = ssub.s32 12544, 12544
      %3425 = vsyncadd [#allocation3], %s3424
      %s3426 = sshll.u32 [#allocation2], 4
      %s3427 = int_to_ptr.vmem [resolvable:$true] %s3426
      %3432 = dma.vmem_to_hbm [thread:$0]  %s3427, 12544, %s4, [#allocation3], 64, 64, 4
    $region21: #{tpu_custom_call.1} parent=1 // pred_fallthru
      _
    // Predicated region
    $region22: #{tpu_custom_call.1} parent=1 // pred_check
      _
    $region23: #{tpu_custom_call.1} parent=1 // pred_check_branch
      %3434 = sbr.rel (0) target = $region25
    $region24: #{tpu_custom_call.1} parent=1 // pred_region
      %3435 = dma.done [#allocation3], 12544
    $region25: #{tpu_custom_call.1} parent=1 // pred_fallthru
      _
    %3436 = vsyncpa [#allocation3], 1

</llo_original>
